<compile_context>
chip_gen: v6e
topology: v6e:2x2x1
jax: 0.10.0
libtpu: 0.0.40
codegen_flags: <defaults>
</compile_context>

<pallas_src>
import functools
import math

import jax
import jax.numpy as jnp
from jax import lax
from jax.experimental import pallas as pl
from jax.experimental.pallas import tpu as pltpu


# ----------------------------------------------------------------------------
# Pallas kernel: flash-style QKV attention in channels-first [B, C, T] layout.
# ----------------------------------------------------------------------------
def _qkv_attention_kernel(q_ref, k_ref, v_ref, o_ref, m_scr, l_scr, acc_scr,
                          *, scale2):
    """One (head-block, kv-block) grid step of online-softmax attention.

    Block shapes:
      q_ref   : (G, C, T)   resident across the kv axis
      k_ref   : (G, C, TK)
      v_ref   : (G, C, TK)
      o_ref   : (G, C, T)   written on the last kv step only
      m_scr   : (G, 1, T)   running row max            (f32)
      l_scr   : (G, 1, T)   running softmax denominator (f32)
      acc_scr : (G, C, T)   running unnormalized output (f32)
    """
    kv = pl.program_id(1)

    @pl.when(kv == 0)
    def _init():
        m_scr[...] = jnp.full(m_scr.shape, -jnp.inf, dtype=m_scr.dtype)
        l_scr[...] = jnp.zeros(l_scr.shape, dtype=l_scr.dtype)
        acc_scr[...] = jnp.zeros(acc_scr.shape, dtype=acc_scr.dtype)

    q = q_ref[...]                       # (G, C, T), native dtype
    # Fold both `* scale` factors of the reference into the (smaller) k tile.
    k = k_ref[...] * scale2              # (G, C, TK), native dtype
    v = v_ref[...]                       # (G, C, TK), native dtype

    # scores[g, s, t] = sum_c k[g, c, s] * q[g, c, t]
    # No explicit transpose; f32 accumulation on the MXU.
    s = lax.dot_general(
        k, q,
        dimension_numbers=(((1,), (1,)), ((0,), (0,))),
        preferred_element_type=jnp.float32,
    )                                    # (G, TK, T), f32

    m_prev = m_scr[...]                                           # (G, 1, T)
    m_new = jnp.maximum(m_prev, jnp.max(s, axis=1, keepdims=True))
    alpha = jnp.exp(m_prev - m_new)                               # (G, 1, T)
    p = jnp.exp(s - m_new)                                        # (G, TK, T)

    l_scr[...] = alpha * l_scr[...] + jnp.sum(p, axis=1, keepdims=True)

    # out[g, c, t] += sum_s v[g, c, s] * p[g, s, t]  — standard (C,K)x(K,T) matmul.
    pv = lax.dot_general(
        v, p.astype(v.dtype),
        dimension_numbers=(((2,), (1,)), ((0,), (0,))),
        preferred_element_type=jnp.float32,
    )                                    # (G, C, T), f32
    acc_scr[...] = alpha * acc_scr[...] + pv
    m_scr[...] = m_new

    @pl.when(kv == pl.num_programs(1) - 1)
    def _finalize():
        # Deferred normalization: divide only the (G,1,T) denominator and scale
        # the (G,C,T) accumulator — never the (T,T) weight matrix.
        o_ref[...] = (acc_scr[...] * (1.0 / l_scr[...])).astype(o_ref.dtype)


# ----------------------------------------------------------------------------
# Tiling heuristics.
# ----------------------------------------------------------------------------
def _sublane_multiple(dtype):
    size = jnp.dtype(dtype).itemsize
    if size >= 4:
        return 8
    if size == 2:
        return 16
    return 32


def _pick_kv_tile(length):
    for cand in (512, 256, 128):
        if length > cand and length % cand == 0:
            return cand
    return length


def _pick_head_block(b, ch_p, length, tk, itemsize,
                     budget_bytes=20 * 1024 * 1024):
    per_head = (
        2 * (ch_p * length + 2 * ch_p * tk) * itemsize   # q,k,v (double-buffered)
        + 2 * ch_p * length * itemsize                   # output (double-buffered)
        + ch_p * length * 4                              # f32 accumulator scratch
        + 2 * length * 4                                 # m / l scratch
        + tk * length * 4                                # transient f32 score tile
    )
    g_max = max(1, budget_bytes // per_head)
    # Keep >= 2 head blocks when possible so the parallel axis can shard across
    # v7x's two TensorCores.
    g_max = int(min(g_max, max(1, b // 2)))
    for g in range(g_max, 0, -1):
        if b % g == 0:
            return g
    return 1


def _attention_bct(q, k, v, ch_orig):
    """softmax((q*scale)^T (k*scale)) applied to v; q/k/v are [B, C, T]."""
    b, ch_p, length = q.shape
    scale2 = 1.0 / math.sqrt(ch_orig)      # (ch^-0.25)^2, folded into k
    dtype = q.dtype
    itemsize = jnp.dtype(dtype).itemsize

    tk = _pick_kv_tile(length)
    g = _pick_head_block(b, ch_p, length, tk, itemsize)
    grid = (b // g, length // tk)

    q_spec = pl.BlockSpec((g, ch_p, length), lambda i, j: (i, 0, 0))
    kv_spec = pl.BlockSpec((g, ch_p, tk), lambda i, j: (i, 0, j))
    o_spec = pl.BlockSpec((g, ch_p, length), lambda i, j: (i, 0, 0))

    kernel = functools.partial(_qkv_attention_kernel, scale2=scale2)

    return pl.pallas_call(
        kernel,
        out_shape=jax.ShapeDtypeStruct((b, ch_p, length), dtype),
        grid_spec=pltpu.PrefetchScalarGridSpec(
            num_scalar_prefetch=0,
            grid=grid,
            in_specs=[q_spec, kv_spec, kv_spec],
            out_specs=o_spec,
            scratch_shapes=[
                pltpu.VMEM((g, 1, length), jnp.float32),      # m
                pltpu.VMEM((g, 1, length), jnp.float32),      # l
                pltpu.VMEM((g, ch_p, length), jnp.float32),   # acc
            ],
        ),
        compiler_params=pltpu.CompilerParams(
            dimension_semantics=("parallel", "arbitrary"),
            vmem_limit_bytes=48 * 1024 * 1024,
        ),
    )(q, k, v)


def qkv_attention(qkv, n_heads, *, order="legacy"):
    """Pallas equivalent of QKVAttentionLegacy / QKVAttention forward.

    :param qkv: [N, 3*H*C, T] array of concatenated Qs, Ks and Vs.
    :param order: "legacy" (AttentionBlock default) or "new".
    :return: [N, H*C, T] array after attention.
    """
    bs, width, length = qkv.shape
    assert width % (3 * n_heads) == 0
    ch = width // (3 * n_heads)
    b = bs * n_heads

    if order == "legacy":
        # QKVAttentionLegacy: [N, H*3*C, T] -> [N*H, 3*C, T] -> split(C)
        qkv_r = qkv.reshape(b, 3 * ch, length)
        q = qkv_r[:, 0 * ch:1 * ch, :]
        k = qkv_r[:, 1 * ch:2 * ch, :]
        v = qkv_r[:, 2 * ch:3 * ch, :]
    elif order == "new":
        # QKVAttention: [N, 3*H*C, T] -> chunk(3, dim=1) -> [N*H, C, T]
        q, k, v = jnp.split(qkv, 3, axis=1)
        q = q.reshape(b, ch, length)
        k = k.reshape(b, ch, length)
        v = v.reshape(b, ch, length)
    else:
        raise ValueError(f"unknown order: {order}")

    # Pad the per-head channel axis to the sublane tile so vregs / MXU rows are
    # dense.  Zero padding is exact: padded q/k rows add 0 to every score and
    # padded v rows only produce all-zero output rows that we slice off.
    mult = _sublane_multiple(qkv.dtype)
    ch_p = ((ch + mult - 1) // mult) * mult
    if ch_p != ch:
        pad = [(0, 0), (0, ch_p - ch), (0, 0)]
        q = jnp.pad(q, pad)
        k = jnp.pad(k, pad)
        v = jnp.pad(v, pad)
    # TODO(synk): also pad/mask T up to a multiple of 128 (lane-dense stores)
    # for ragged sequence lengths; requires -inf masking of padded key columns.

    a = _attention_bct(q, k, v, ch)
    if ch_p != ch:
        a = a[:, :ch, :]
    return a.reshape(bs, n_heads * ch, length)


# ----------------------------------------------------------------------------
# AttentionBlock forward: plain-JAX glue around the Pallas attention kernel.
# ----------------------------------------------------------------------------
def _group_norm32(x, gamma, beta, *, num_groups=32, eps=1e-5):
    # guided-diffusion GroupNorm32: nn.GroupNorm(32, C) computed in float32.
    b, c, t = x.shape
    xg = x.astype(jnp.float32).reshape(b, num_groups, c // num_groups, t)
    mean = jnp.mean(xg, axis=(2, 3), keepdims=True)
    var = jnp.var(xg, axis=(2, 3), keepdims=True)
    xg = (xg - mean) * lax.rsqrt(var + eps)
    xn = xg.reshape(b, c, t)
    xn = (xn * gamma.astype(jnp.float32)[None, :, None]
          + beta.astype(jnp.float32)[None, :, None])
    return xn.astype(x.dtype)


def _conv1x1(x, w, b):
    # conv_nd(1, cin, cout, 1): weight (cout, cin, 1) folded to (cout, cin).
    return jnp.einsum("oc,bct->bot", w, x) + b[None, :, None]


def attention_block_forward(x, params, num_heads):
    """AttentionBlock._forward (use_new_attention_order=False -> legacy attn)."""
    b, c = x.shape[0], x.shape[1]
    xf = x.reshape(b, c, -1)
    h = _group_norm32(xf, params["norm_gamma"], params["norm_beta"])
    qkv = _conv1x1(h, params["qkv_w"], params["qkv_b"])
    h = qkv_attention(qkv, num_heads, order="legacy")
    h = _conv1x1(h, params["proj_w"], params["proj_b"])
    return (xf + h).reshape(x.shape)


# ----------------------------------------------------------------------------
# Pure-JAX references (match the PyTorch forward exactly).
# ----------------------------------------------------------------------------
def _attention_reference(qkv, n_heads, *, order="legacy"):
    bs, width, length = qkv.shape
    ch = width // (3 * n_heads)
    b = bs * n_heads
    if order == "legacy":
        qkv_r = qkv.reshape(b, 3 * ch, length)
        q, k, v = qkv_r[:, :ch], qkv_r[:, ch:2 * ch], qkv_r[:, 2 * ch:]
    else:
        q, k, v = jnp.split(qkv, 3, axis=1)
        q = q.reshape(b, ch, length)
        k = k.reshape(b, ch, length)
        v = v.reshape(b, ch, length)
    scale = 1.0 / math.sqrt(math.sqrt(ch))
    w = jnp.einsum("bct,bcs->bts", q * scale, k * scale,
                   precision=lax.Precision.HIGHEST)
    w = jax.nn.softmax(w.astype(jnp.float32), axis=-1).astype(qkv.dtype)
    a = jnp.einsum("bts,bcs->bct", w, v, precision=lax.Precision.HIGHEST)
    return a.reshape(bs, n_heads * ch, length)


def attention_block_reference(x, params, num_heads):
    b, c = x.shape[0], x.shape[1]
    xf = x.reshape(b, c, -1)
    h = _group_norm32(xf, params["norm_gamma"], params["norm_beta"])
    qkv = _conv1x1(h, params["qkv_w"], params["qkv_b"])
    h = _attention_reference(qkv, num_heads, order="legacy")
    h = _conv1x1(h, params["proj_w"], params["proj_b"])
    return (xf + h).reshape(x.shape)


if __name__ == "__main__":
    key = jax.random.PRNGKey(0)
    N, C, H, W = 2, 32, 8, 8          # x: [2, 32, 8, 8] -> T = 64
    num_heads = 4                      # per-head channels = 8

    k_x, k_qw, k_qb, k_pw, k_pb, k_ng, k_nb = jax.random.split(key, 7)
    x = jax.random.normal(k_x, (N, C, H, W), dtype=jnp.float32)
    params = {
        "norm_gamma": 1.0 + 0.1 * jax.random.normal(k_ng, (C,), dtype=jnp.float32),
        "norm_beta": 0.1 * jax.random.normal(k_nb, (C,), dtype=jnp.float32),
        "qkv_w": 0.2 * jax.random.normal(k_qw, (3 * C, C), dtype=jnp.float32),
        "qkv_b": 0.05 * jax.random.normal(k_qb, (3 * C,), dtype=jnp.float32),
        # NOTE: the PyTorch module zero-initializes proj_out; non-zero weights
        # are used here so the test exercises the full forward path.
        "proj_w": 0.2 * jax.random.normal(k_pw, (C, C), dtype=jnp.float32),
        "proj_b": 0.05 * jax.random.normal(k_pb, (C,), dtype=jnp.float32),
    }

    # 1) Attention hot path: Pallas kernel vs pure-JAX reference (both orders).
    qkv_in = _conv1x1(
        _group_norm32(x.reshape(N, C, -1), params["norm_gamma"], params["norm_beta"]),
        params["qkv_w"], params["qkv_b"])
    for order in ("legacy", "new"):
        out = jax.block_until_ready(qkv_attention(qkv_in, num_heads, order=order))
        ref = _attention_reference(qkv_in, num_heads, order=order)
        assert out.shape == ref.shape
        assert jnp.allclose(out, ref, atol=2e-4, rtol=2e-4), (
            f"attention ({order}) mismatch: {jnp.max(jnp.abs(out - ref))}")

    # 2) Full AttentionBlock forward (norm -> qkv conv -> attn -> proj -> +x).
    y = jax.block_until_ready(attention_block_forward(x, params, num_heads))
    y_ref = attention_block_reference(x, params, num_heads)
    assert y.shape == x.shape
    assert jnp.allclose(y, y_ref, atol=2e-4, rtol=2e-4), (
        f"block mismatch: {jnp.max(jnp.abs(y - y_ref))}")

    print("KERNEL_OK")
</pallas_src>

<mosaic_0001>
module attributes {stable_mosaic.version = 11 : i64} {
  func.func @_qkv_attention_kernel(%arg0: i32, %arg1: i32, %arg2: memref<4x8x64xf32, #tpu.memory_space<vmem>>, %arg3: memref<4x8x64xf32, #tpu.memory_space<vmem>>, %arg4: memref<4x8x64xf32, #tpu.memory_space<vmem>>, %arg5: memref<4x8x64xf32, #tpu.memory_space<vmem>>, %arg6: memref<4x1x64xf32, #tpu.memory_space<vmem>>, %arg7: memref<4x1x64xf32, #tpu.memory_space<vmem>>, %arg8: memref<4x8x64xf32, #tpu.memory_space<vmem>>) attributes {dimension_semantics = [#tpu.dimension_semantics<parallel>, #tpu.dimension_semantics<arbitrary>], iteration_bounds = array<i64: 2, 1>, scalar_prefetch = 0 : i64, scratch_operands = 3 : i64, tpu.core_type = #tpu.core_type<tc>, window_params = [{transform_indices = @transform_0, window_bounds = array<i64: 4, 8, 64>}, {transform_indices = @transform_1, window_bounds = array<i64: 4, 8, 64>}, {transform_indices = @transform_2, window_bounds = array<i64: 4, 8, 64>}, {transform_indices = @transform_3, window_bounds = array<i64: 4, 8, 64>}]} {
    %c0_i32 = arith.constant 0 : i32
    %0 = arith.cmpi eq, %arg1, %c0_i32 : i32
    %1 = arith.extui %0 : i1 to i32
    %c0_i32_0 = arith.constant 0 : i32
    %2 = arith.cmpi ne, %1, %c0_i32_0 : i32
    scf.if %2 {
      %cst_33 = arith.constant 0xFF800000 : f32
      %34 = vector.broadcast %cst_33 : f32 to vector<4x1x64xf32>
      %c0_34 = arith.constant 0 : index
      %c0_35 = arith.constant 0 : index
      %c0_36 = arith.constant 0 : index
      %35 = vector.load %arg6[%c0_34, %c0_35, %c0_36] : memref<4x1x64xf32, #tpu.memory_space<vmem>>, vector<4x1x64xf32>
      tpu.vector_store %arg6[%c0_34, %c0_35, %c0_36], %34 {strides = array<i32>} : memref<4x1x64xf32, #tpu.memory_space<vmem>>, vector<4x1x64xf32>,
      %cst_37 = arith.constant 0.000000e+00 : f32
      %36 = vector.broadcast %cst_37 : f32 to vector<4x1x64xf32>
      %c0_38 = arith.constant 0 : index
      %c0_39 = arith.constant 0 : index
      %c0_40 = arith.constant 0 : index
      %37 = vector.load %arg7[%c0_38, %c0_39, %c0_40] : memref<4x1x64xf32, #tpu.memory_space<vmem>>, vector<4x1x64xf32>
      tpu.vector_store %arg7[%c0_38, %c0_39, %c0_40], %36 {strides = array<i32>} : memref<4x1x64xf32, #tpu.memory_space<vmem>>, vector<4x1x64xf32>,
      %cst_41 = arith.constant 0.000000e+00 : f32
      %38 = vector.broadcast %cst_41 : f32 to vector<4x8x64xf32>
      %c0_42 = arith.constant 0 : index
      %c0_43 = arith.constant 0 : index
      %c0_44 = arith.constant 0 : index
      %39 = vector.load %arg8[%c0_42, %c0_43, %c0_44] : memref<4x8x64xf32, #tpu.memory_space<vmem>>, vector<4x8x64xf32>
      tpu.vector_store %arg8[%c0_42, %c0_43, %c0_44], %38 {strides = array<i32>} : memref<4x8x64xf32, #tpu.memory_space<vmem>>, vector<4x8x64xf32>,
    } else {
    }
    %c0 = arith.constant 0 : index
    %c0_1 = arith.constant 0 : index
    %c0_2 = arith.constant 0 : index
    %3 = vector.load %arg2[%c0, %c0_1, %c0_2] : memref<4x8x64xf32, #tpu.memory_space<vmem>>, vector<4x8x64xf32>
    %c0_3 = arith.constant 0 : index
    %c0_4 = arith.constant 0 : index
    %c0_5 = arith.constant 0 : index
    %4 = vector.load %arg3[%c0_3, %c0_4, %c0_5] : memref<4x8x64xf32, #tpu.memory_space<vmem>>, vector<4x8x64xf32>
    %cst = arith.constant 0.353553385 : f32
    %5 = vector.broadcast %cst : f32 to vector<4x8x64xf32>
    %6 = arith.mulf %4, %5 : vector<4x8x64xf32>
    %c0_6 = arith.constant 0 : index
    %c0_7 = arith.constant 0 : index
    %c0_8 = arith.constant 0 : index
    %7 = vector.load %arg4[%c0_6, %c0_7, %c0_8] : memref<4x8x64xf32, #tpu.memory_space<vmem>>, vector<4x8x64xf32>
    %cst_9 = arith.constant dense<0.000000e+00> : vector<4x64x64xf32>
    %8 = tpu.matmul %6, %3, %cst_9 {dimension_numbers = #tpu.dot_dimension_numbers<[1], [1], [2], [2], [0, 0, 0, 2, 1, 2], [0], [0]>} : vector<4x8x64xf32>, vector<4x8x64xf32>, vector<4x64x64xf32> -> vector<4x64x64xf32>
    %c0_10 = arith.constant 0 : index
    %c0_11 = arith.constant 0 : index
    %c0_12 = arith.constant 0 : index
    %9 = vector.load %arg6[%c0_10, %c0_11, %c0_12] : memref<4x1x64xf32, #tpu.memory_space<vmem>>, vector<4x1x64xf32>
    %cst_13 = arith.constant dense<0xFF800000> : vector<4x64xf32>
    %10 = vector.multi_reduction <maximumf>, %8, %cst_13 [1] : vector<4x64x64xf32> to vector<4x64xf32>
    %11 = vector.shape_cast %10 : vector<4x64xf32> to vector<4x1x64xf32>
    %12 = arith.maximumf %9, %11 : vector<4x1x64xf32>
    %13 = arith.subf %9, %12 : vector<4x1x64xf32>
    %14 = math.exp %13 : vector<4x1x64xf32>
    %15 = vector.broadcast %12 : vector<4x1x64xf32> to vector<4x64x64xf32>
    %16 = arith.subf %8, %15 : vector<4x64x64xf32>
    %17 = math.exp %16 : vector<4x64x64xf32>
    %c0_14 = arith.constant 0 : index
    %c0_15 = arith.constant 0 : index
    %c0_16 = arith.constant 0 : index
    %18 = vector.load %arg7[%c0_14, %c0_15, %c0_16] : memref<4x1x64xf32, #tpu.memory_space<vmem>>, vector<4x1x64xf32>
    %19 = arith.mulf %14, %18 : vector<4x1x64xf32>
    %cst_17 = arith.constant dense<0.000000e+00> : vector<4x64xf32>
    %20 = vector.multi_reduction <add>, %17, %cst_17 [1] : vector<4x64x64xf32> to vector<4x64xf32>
    %21 = vector.shape_cast %20 : vector<4x64xf32> to vector<4x1x64xf32>
    %22 = arith.addf %19, %21 : vector<4x1x64xf32>
    %c0_18 = arith.constant 0 : index
    %c0_19 = arith.constant 0 : index
    %c0_20 = arith.constant 0 : index
    %23 = vector.load %arg7[%c0_18, %c0_19, %c0_20] : memref<4x1x64xf32, #tpu.memory_space<vmem>>, vector<4x1x64xf32>
    tpu.vector_store %arg7[%c0_18, %c0_19, %c0_20], %22 {strides = array<i32>} : memref<4x1x64xf32, #tpu.memory_space<vmem>>, vector<4x1x64xf32>,
    %cst_21 = arith.constant dense<0.000000e+00> : vector<4x8x64xf32>
    %24 = tpu.matmul %7, %17, %cst_21 {dimension_numbers = #tpu.dot_dimension_numbers<[2], [1], [1], [2], [0, 0, 0, 1, 1, 2], [0], [0]>} : vector<4x8x64xf32>, vector<4x64x64xf32>, vector<4x8x64xf32> -> vector<4x8x64xf32>
    %c0_22 = arith.constant 0 : index
    %c0_23 = arith.constant 0 : index
    %c0_24 = arith.constant 0 : index
    %25 = vector.load %arg8[%c0_22, %c0_23, %c0_24] : memref<4x8x64xf32, #tpu.memory_space<vmem>>, vector<4x8x64xf32>
    %26 = vector.broadcast %14 : vector<4x1x64xf32> to vector<4x8x64xf32>
    %27 = arith.mulf %26, %25 : vector<4x8x64xf32>
    %28 = arith.addf %27, %24 : vector<4x8x64xf32>
    %c0_25 = arith.constant 0 : index
    %c0_26 = arith.constant 0 : index
    %c0_27 = arith.constant 0 : index
    %29 = vector.load %arg8[%c0_25, %c0_26, %c0_27] : memref<4x8x64xf32, #tpu.memory_space<vmem>>, vector<4x8x64xf32>
    tpu.vector_store %arg8[%c0_25, %c0_26, %c0_27], %28 {strides = array<i32>} : memref<4x8x64xf32, #tpu.memory_space<vmem>>, vector<4x8x64xf32>,
    %c0_28 = arith.constant 0 : index
    %c0_29 = arith.constant 0 : index
    %c0_30 = arith.constant 0 : index
    %30 = vector.load %arg6[%c0_28, %c0_29, %c0_30] : memref<4x1x64xf32, #tpu.memory_space<vmem>>, vector<4x1x64xf32>
    tpu.vector_store %arg6[%c0_28, %c0_29, %c0_30], %12 {strides = array<i32>} : memref<4x1x64xf32, #tpu.memory_space<vmem>>, vector<4x1x64xf32>,
    %c0_i32_31 = arith.constant 0 : i32
    %31 = arith.cmpi eq, %arg1, %c0_i32_31 : i32
    %32 = arith.extui %31 : i1 to i32
    %c0_i32_32 = arith.constant 0 : i32
    %33 = arith.cmpi ne, %32, %c0_i32_32 : i32
    scf.if %33 {
      %c0_33 = arith.constant 0 : index
      %c0_34 = arith.constant 0 : index
      %c0_35 = arith.constant 0 : index
      %34 = vector.load %arg8[%c0_33, %c0_34, %c0_35] : memref<4x8x64xf32, #tpu.memory_space<vmem>>, vector<4x8x64xf32>
      %c0_36 = arith.constant 0 : index
      %c0_37 = arith.constant 0 : index
      %c0_38 = arith.constant 0 : index
      %35 = vector.load %arg7[%c0_36, %c0_37, %c0_38] : memref<4x1x64xf32, #tpu.memory_space<vmem>>, vector<4x1x64xf32>
      %cst_39 = arith.constant 1.000000e+00 : f32
      %36 = vector.broadcast %cst_39 : f32 to vector<4x1x64xf32>
      %37 = arith.divf %36, %35 : vector<4x1x64xf32>
      %38 = vector.broadcast %37 : vector<4x1x64xf32> to vector<4x8x64xf32>
      %39 = arith.mulf %34, %38 : vector<4x8x64xf32>
      %c0_40 = arith.constant 0 : index
      %c0_41 = arith.constant 0 : index
      %c0_42 = arith.constant 0 : index
      %40 = vector.load %arg5[%c0_40, %c0_41, %c0_42] : memref<4x8x64xf32, #tpu.memory_space<vmem>>, vector<4x8x64xf32>
      tpu.vector_store %arg5[%c0_40, %c0_41, %c0_42], %39 {strides = array<i32>} : memref<4x8x64xf32, #tpu.memory_space<vmem>>, vector<4x8x64xf32>,
    } else {
    }
    return
  }
  func.func @transform_0(%arg0: i32, %arg1: i32) -> (i32, i32, i32) {
    %c0_i32 = arith.constant 0 : i32
    %c0_i32_0 = arith.constant 0 : i32
    %c0_i32_1 = arith.constant 0 : i32
    return %arg0, %c0_i32, %c0_i32_0 : i32, i32, i32
  }
  func.func @transform_1(%arg0: i32, %arg1: i32) -> (i32, i32, i32) {
    %c0_i32 = arith.constant 0 : i32
    %c0_i32_0 = arith.constant 0 : i32
    return %arg0, %c0_i32, %arg1 : i32, i32, i32
  }
  func.func @transform_2(%arg0: i32, %arg1: i32) -> (i32, i32, i32) {
    %c0_i32 = arith.constant 0 : i32
    %c0_i32_0 = arith.constant 0 : i32
    return %arg0, %c0_i32, %arg1 : i32, i32, i32
  }
  func.func @transform_3(%arg0: i32, %arg1: i32) -> (i32, i32, i32) {
    %c0_i32 = arith.constant 0 : i32
    %c0_i32_0 = arith.constant 0 : i32
    %c0_i32_1 = arith.constant 0 : i32
    return %arg0, %c0_i32, %c0_i32_0 : i32, i32, i32
  }
}

</mosaic_0001>

<llo_original>
// kernel: tpu_custom_call.1
$region0: #{tpu_custom_call.1}
  #allocation0 [shape = 'u32[]', space=smem, size = 0x4, offset = 0x4, fixed_abs, tag = 'smem constant byte address 0x4 - core index']
  #allocation1 [shape = 'u32[144,128]{1,0:T(1,128)}', space=vmem, size = 0x12000, scoped, tag = 'internal scratch']
  #allocation2 [shape = 'f32[4,1,64]{2,1,0:T(1,128)}', space=vmem, size = 0x800, scoped, tag = 'scratch operand']
  #allocation3 [shape = 'f32[4,1,64]{2,1,0:T(1,128)}', space=vmem, size = 0x800, scoped, tag = 'scratch operand']
  #allocation4 [shape = 'f32[4,8,64]{2,1,0:T(8,128)}', space=vmem, size = 0x4000, scoped, tag = 'scratch operand']
  %s0 = inlined_call_operand.hbm [shape: f32[8,8,64], index: 0, kind: input, shape index: {}]
  %s1 = inlined_call_operand.hbm [shape: f32[8,8,64], index: 1, kind: input, shape index: {}]
  %s2 = inlined_call_operand.hbm [shape: f32[8,8,64], index: 2, kind: input, shape index: {}]
  %s3 = inlined_call_operand.hbm [shape: f32[8,8,64], index: 3, kind: output, shape index: {}]
  %s4 = sld [smem:[#allocation0]]
  $region65: #{tpu_custom_call.1} parent=0
    _
  %s6 = ssub.s32 1, %s4
  %s7 = scalar_select 0, %s6, %s4
  $region1: #{tpu_custom_call.1} parent=0
    #allocation5 [shape = 'u8[32768]{0}', space=vmem, size = 0x8000, scoped, tag = 'input window, operand 0']
    #allocation6 [shape = 's32[2]{0}', space=sflag, size = 0x8, scoped, tag = 'scoped memory for tpu_custom_call.1']
    #allocation7 [shape = 's32[2]{0}', space=sflag, size = 0x8, scoped, tag = 'scoped memory for tpu_custom_call.1']
    #allocation8 [shape = 'u8[32768]{0}', space=vmem, size = 0x8000, scoped, tag = 'input window, operand 1']
    #allocation9 [shape = 's32[2]{0}', space=sflag, size = 0x8, scoped, tag = 'scoped memory for tpu_custom_call.1']
    #allocation10 [shape = 'u8[32768]{0}', space=vmem, size = 0x8000, scoped, tag = 'input window, operand 2']
    #allocation11 [shape = 'u8[32768]{0}', space=vmem, size = 0x8000, scoped, tag = 'output window, operand 0']
    %8 = vsyncpa [#allocation6], 0
    %s9 = scalar_lea.sflag [#allocation6], 1
    %10 = vsyncpa %s9, 0
    %11 = vsyncpa [#allocation9], 0
    %s12 = scalar_lea.sflag [#allocation9], 1
    %13 = vsyncpa %s12, 0
    %14 = vsyncpa [#allocation7], 0
    %s15 = scalar_lea.sflag [#allocation7], 1
    %16 = vsyncpa %s15, 0
    loop: start=0, step=1, limit=4
    $region2: #{tpu_custom_call.1} parent=1 // loop_pre_header
      _
    $region3: #{tpu_custom_call.1} parent=1 // loop_header
      %s18 = sphi 0, %s22
      %p19 = scmp.ge.s32.totalorder %s18, 4
      %s25 = sphi 0, %s37
      %s26 = sphi 0, %s33
      %s27 = sphi 0, %s25
      %s28 = sphi 0, %s26
      %s29 = sphi 0, %s27
      %s30 = sphi 0, %s28
      %s40 = sphi 0, %s42
      %s43 = sphi 0, %s40
      %s44 = sphi 0, %s43
      %s60 = sphi 0, %s44
      %s68 = sphi 0, %s70
      %s71 = sphi 0, %s68
      %s72 = sphi 0, %s71
      %s88 = sphi 0, %s72
      %s96 = sphi 0, %s98
      %s99 = sphi 0, %s96
      %s100 = sphi 0, %s99
      %s116 = sphi 0, %s100
      %s122 = sphi 0, %s124
      %s125 = sphi 0, %s122
      %s126 = sphi 0, %s125
      %s142 = sphi 0, %s126
    $region4: #{tpu_custom_call.1} parent=1 // loop_header_branch
      %21 = sbr.rel (%p19) target = $region8
    $region5: #{tpu_custom_call.1} parent=1 // loop_body
      %s23 = ssub.s32 %s18, 1
      %s24 = ssub.s32 %s18, 2
      %s31 = sadd.s32 1, %s26
      %p32 = scmp.ge.s32.totalorder %s31, 1
      %s33 = scalar_select %p32, 0, %s31
      %s34 = sadd.s32 1, %s25
      %s35 = scalar_select %p32, %s34, %s25
      %p36 = scmp.ge.s32.totalorder %s35, 2
      %s37 = scalar_select %p36, 0, %s35
      %s38 = ssub.s32 %s25, %s37
      %p39 = scmp.eq.s32.totalorder %s38, 0
      %s41 = sadd.s32 %s40, 1
      %s42 = scalar_select %p39, %s40, %s41
      %p45 = pneg %p39
      %p46 = scmp.eq.s32.totalorder %s18, 1
      %p47 = por %p45, %p46
      %p48 = scmp.ne.s32.totalorder %s40, %s43
      %p49 = scmp.eq.s32.totalorder %s18, 0
      %p50 = por %p48, %p49
      %p51 = scmp.ne.s32.totalorder %s40, %s43
      %p52 = scmp.eq.s32.totalorder %s23, 1
      %p53 = por %p51, %p52
      %p54 = scmp.ne.s32.totalorder %s43, %s44
      %p55 = scmp.eq.s32.totalorder %s23, 0
      %p56 = por %p54, %p55
      %p57 = scmp.ne.s32.totalorder %s43, %s44
      %p58 = scmp.eq.s32.totalorder %s24, 1
      %p59 = por %p57, %p58
      %p61 = scmp.ne.s32.totalorder %s44, %s60
      %p62 = scmp.eq.s32.totalorder %s24, 0
      %p63 = por %p61, %p62
      %s64 = ssub.s32 %s25, %s37
      %s65 = ssub.s32 %s26, %s33
      %s66 = sor.u32 %s64, %s65
      %p67 = scmp.eq.s32.totalorder %s66, 0
      %s69 = sadd.s32 %s68, 1
      %s70 = scalar_select %p67, %s68, %s69
      %p73 = pneg %p67
      %p74 = scmp.eq.s32.totalorder %s18, 1
      %p75 = por %p73, %p74
      %p76 = scmp.ne.s32.totalorder %s68, %s71
      %p77 = scmp.eq.s32.totalorder %s18, 0
      %p78 = por %p76, %p77
      %p79 = scmp.ne.s32.totalorder %s68, %s71
      %p80 = scmp.eq.s32.totalorder %s23, 1
      %p81 = por %p79, %p80
      %p82 = scmp.ne.s32.totalorder %s71, %s72
      %p83 = scmp.eq.s32.totalorder %s23, 0
      %p84 = por %p82, %p83
      %p85 = scmp.ne.s32.totalorder %s71, %s72
      %p86 = scmp.eq.s32.totalorder %s24, 1
      %p87 = por %p85, %p86
      %p89 = scmp.ne.s32.totalorder %s72, %s88
      %p90 = scmp.eq.s32.totalorder %s24, 0
      %p91 = por %p89, %p90
      %s92 = ssub.s32 %s25, %s37
      %s93 = ssub.s32 %s26, %s33
      %s94 = sor.u32 %s92, %s93
      %p95 = scmp.eq.s32.totalorder %s94, 0
      %s97 = sadd.s32 %s96, 1
      %s98 = scalar_select %p95, %s96, %s97
      %p101 = pneg %p95
      %p102 = scmp.eq.s32.totalorder %s18, 1
      %p103 = por %p101, %p102
      %p104 = scmp.ne.s32.totalorder %s96, %s99
      %p105 = scmp.eq.s32.totalorder %s18, 0
      %p106 = por %p104, %p105
      %p107 = scmp.ne.s32.totalorder %s96, %s99
      %p108 = scmp.eq.s32.totalorder %s23, 1
      %p109 = por %p107, %p108
      %p110 = scmp.ne.s32.totalorder %s99, %s100
      %p111 = scmp.eq.s32.totalorder %s23, 0
      %p112 = por %p110, %p111
      %p113 = scmp.ne.s32.totalorder %s99, %s100
      %p114 = scmp.eq.s32.totalorder %s24, 1
      %p115 = por %p113, %p114
      %p117 = scmp.ne.s32.totalorder %s100, %s116
      %p118 = scmp.eq.s32.totalorder %s24, 0
      %p119 = por %p117, %p118
      %s120 = ssub.s32 %s25, %s37
      %p121 = scmp.eq.s32.totalorder %s120, 0
      %s123 = sadd.s32 %s122, 1
      %s124 = scalar_select %p121, %s122, %s123
      %p127 = pneg %p121
      %p128 = scmp.eq.s32.totalorder %s18, 1
      %p129 = por %p127, %p128
      %p130 = scmp.ne.s32.totalorder %s122, %s125
      %p131 = scmp.eq.s32.totalorder %s18, 0
      %p132 = por %p130, %p131
      %p133 = scmp.ne.s32.totalorder %s122, %s125
      %p134 = scmp.eq.s32.totalorder %s23, 1
      %p135 = por %p133, %p134
      %p136 = scmp.ne.s32.totalorder %s125, %s126
      %p137 = scmp.eq.s32.totalorder %s23, 0
      %p138 = por %p136, %p137
      %p139 = scmp.ne.s32.totalorder %s125, %s126
      %p140 = scmp.eq.s32.totalorder %s24, 1
      %p141 = por %p139, %p140
      %p143 = scmp.ne.s32.totalorder %s126, %s142
      %p144 = scmp.eq.s32.totalorder %s24, 0
      %p145 = por %p143, %p144
      %p146 = scmp.le.s32.totalorder 1, %s18
      %p147 = scmp.lt.s32.totalorder %s18, 3
      %p148 = pnand %p146, %p147
      %p149 = pneg %p148
      // Predicated region
      $region9: #{tpu_custom_call.1} parent=5 // pred_check
        _
      $region10: #{tpu_custom_call.1} parent=5 // pred_check_branch
        %151 = sbr.rel (%p148) target = $region12
      $region11: #{tpu_custom_call.1} parent=5 // pred_region
        %s152 = ssub.s32 %s18, 1
      $region12: #{tpu_custom_call.1} parent=5 // pred_fallthru
        _
      %p153 = scmp.lt.s32.totalorder %s18, 2
      // Predicated region
      $region13: #{tpu_custom_call.1} parent=5 // pred_check
        %p154 = pneg %p153
      $region14: #{tpu_custom_call.1} parent=5 // pred_check_branch
        %156 = sbr.rel (%p154) target = $region16
      $region15: #{tpu_custom_call.1} parent=5 // pred_region
        // Predicated region
        $region17: #{tpu_custom_call.1} parent=15 // pred_check
          %p157 = pneg %p50
        $region18: #{tpu_custom_call.1} parent=15 // pred_check_branch
          %159 = sbr.rel (%p157) target = $region20
        $region19: #{tpu_custom_call.1} parent=15 // pred_region
          %s160 = sand.u32 %s40, 1
          %s161 = scalar_lea.sflag [#allocation6], %s160
          %s162 = sand.u32 %s40, 1
          %s163 = smul.addr %s162, 32
          %s164 = scalar_lea.vmem [#allocation5], %s163
          %s165 = smul.u32 4, %s25
          %s167 = ssub.s32 512, 512
          %168 = vsyncadd %s161, %s167
          %s169 = smul.addr %s165, 128
          %s170 = scalar_lea.hbm %s0, %s169
          %s171 = sshll.u32 %s164, 4
          %s172 = int_to_ptr.vmem [resolvable:$true] %s171
          %177 = dma.hbm_to_vmem [thread:$0]  %s170, 512, %s172, %s161, 128, 128, 8
        $region20: #{tpu_custom_call.1} parent=15 // pred_fallthru
          _
        // Predicated region
        $region21: #{tpu_custom_call.1} parent=15 // pred_check
          %p178 = pneg %p78
        $region22: #{tpu_custom_call.1} parent=15 // pred_check_branch
          %180 = sbr.rel (%p178) target = $region24
        $region23: #{tpu_custom_call.1} parent=15 // pred_region
          %s181 = sand.u32 %s18, 1
          %s182 = scalar_lea.sflag [#allocation9], %s181
          %s183 = sand.u32 %s68, 1
          %s184 = smul.addr %s183, 32
          %s185 = scalar_lea.vmem [#allocation8], %s184
          %s186 = smul.u32 4, %s25
          %s188 = ssub.s32 512, 512
          %189 = vsyncadd %s182, %s188
          %s190 = sadd.s32 %s26, %s186
          %s191 = smul.addr %s190, 128
          %s192 = scalar_lea.hbm %s1, %s191
          %s193 = sshll.u32 %s185, 4
          %s194 = int_to_ptr.vmem [resolvable:$true] %s193
          %199 = dma.hbm_to_vmem [thread:$0]  %s192, 512, %s194, %s182, 128, 128, 8
        $region24: #{tpu_custom_call.1} parent=15 // pred_fallthru
          _
        // Predicated region
        $region25: #{tpu_custom_call.1} parent=15 // pred_check
          %p200 = pneg %p106
        $region26: #{tpu_custom_call.1} parent=15 // pred_check_branch
          %202 = sbr.rel (%p200) target = $region28
        $region27: #{tpu_custom_call.1} parent=15 // pred_region
          %s203 = sand.u32 %s18, 1
          %s204 = scalar_lea.sflag [#allocation9], %s203
          %s205 = sand.u32 %s96, 1
          %s206 = smul.addr %s205, 32
          %s207 = scalar_lea.vmem [#allocation10], %s206
          %s208 = smul.u32 4, %s25
          %s210 = ssub.s32 512, 512
          %211 = vsyncadd %s204, %s210
          %s212 = sadd.s32 %s26, %s208
          %s213 = smul.addr %s212, 128
          %s214 = scalar_lea.hbm %s2, %s213
          %s215 = sshll.u32 %s207, 4
          %s216 = int_to_ptr.vmem [resolvable:$true] %s215
          %221 = dma.hbm_to_vmem [thread:$0]  %s214, 512, %s216, %s204, 128, 128, 8
        $region28: #{tpu_custom_call.1} parent=15 // pred_fallthru
          _
      $region16: #{tpu_custom_call.1} parent=5 // pred_fallthru
        _
      %p222 = scmp.le.s32.totalorder 1, %s18
      %p223 = scmp.lt.s32.totalorder %s18, 3
      %p224 = pnand %p222, %p223
      %p225 = pneg %p224
      // Predicated region
      $region29: #{tpu_custom_call.1} parent=5 // pred_check
        _
      $region30: #{tpu_custom_call.1} parent=5 // pred_check_branch
        %227 = sbr.rel (%p224) target = $region32
      $region31: #{tpu_custom_call.1} parent=5 // pred_region
        %s228 = ssub.s32 %s18, 1
        %s229 = sand.u32 %s43, 1
        %s230 = scalar_lea.sflag [#allocation6], %s229
        %s231 = sand.u32 %s43, 1
        %s232 = smul.addr %s231, 32
        %s233 = scalar_lea.vmem [#allocation5], %s232
        // Predicated region
        $region33: #{tpu_custom_call.1} parent=31 // pred_check
          %p234 = pneg %p56
        $region34: #{tpu_custom_call.1} parent=31 // pred_check_branch
          %236 = sbr.rel (%p234) target = $region36
        $region35: #{tpu_custom_call.1} parent=31 // pred_region
          %237 = dma.done %s230, 512
        $region36: #{tpu_custom_call.1} parent=31 // pred_fallthru
          _
        %s238 = sand.u32 %s23, 1
        %s239 = scalar_lea.sflag [#allocation9], %s238
        %s240 = sand.u32 %s71, 1
        %s241 = smul.addr %s240, 32
        %s242 = scalar_lea.vmem [#allocation8], %s241
        // Predicated region
        $region37: #{tpu_custom_call.1} parent=31 // pred_check
          %p243 = pneg %p84
        $region38: #{tpu_custom_call.1} parent=31 // pred_check_branch
          %245 = sbr.rel (%p243) target = $region40
        $region39: #{tpu_custom_call.1} parent=31 // pred_region
          %246 = dma.done %s239, 512
        $region40: #{tpu_custom_call.1} parent=31 // pred_fallthru
          _
        %s247 = sand.u32 %s23, 1
        %s248 = scalar_lea.sflag [#allocation9], %s247
        %s249 = sand.u32 %s99, 1
        %s250 = smul.addr %s249, 32
        %s251 = scalar_lea.vmem [#allocation10], %s250
        // Predicated region
        $region41: #{tpu_custom_call.1} parent=31 // pred_check
          %p252 = pneg %p112
        $region42: #{tpu_custom_call.1} parent=31 // pred_check_branch
          %254 = sbr.rel (%p252) target = $region44
        $region43: #{tpu_custom_call.1} parent=31 // pred_region
          %255 = dma.done %s248, 512
        $region44: #{tpu_custom_call.1} parent=31 // pred_fallthru
          _
        %s256 = sand.u32 %s43, 1
        %s257 = scalar_lea.sflag [#allocation6], %s256
        %s258 = sand.u32 %s43, 1
        %s259 = smul.addr %s258, 32
        %s260 = scalar_lea.vmem [#allocation5], %s259
        %p261 = pneg %p56
        %p262 = pneg %p53
        %s263 = sand.u32 %s23, 1
        %s264 = scalar_lea.sflag [#allocation9], %s263
        %s265 = sand.u32 %s71, 1
        %s266 = smul.addr %s265, 32
        %s267 = scalar_lea.vmem [#allocation8], %s266
        %p268 = pneg %p84
        %p269 = pneg %p81
        %s270 = sand.u32 %s23, 1
        %s271 = scalar_lea.sflag [#allocation9], %s270
        %s272 = sand.u32 %s99, 1
        %s273 = smul.addr %s272, 32
        %s274 = scalar_lea.vmem [#allocation10], %s273
        %p275 = pneg %p112
        %p276 = pneg %p109
        %p277 = pneg %p138
        %p278 = pneg %p135
        %s279 = sand.u32 %s125, 1
        %s280 = scalar_lea.sflag [#allocation7], %s279
        %s281 = sand.u32 %s125, 1
        %s282 = smul.addr %s281, 32
        %s283 = scalar_lea.vmem [#allocation11], %s282
        %s284 = smul.u32 4, %s27
        %s285 = smul.u32 4, %s27
        %s286 = smul.u32 4, %s27
        %s287 = smul.u32 4, %s27
        %p288 = scmp.eq.s32.totalorder %s28, 0
        // Predicated region
        $region45: #{tpu_custom_call.1} parent=31 // pred_check
          %p289 = pneg %p288
        $region46: #{tpu_custom_call.1} parent=31 // pred_check_branch
          %291 = sbr.rel (%p289) target = $region48
        $region47: #{tpu_custom_call.1} parent=31 // pred_region
          %vm292 = vcmask 516096
          %293 = vst.msk [vmem:[#allocation2] sm:$0x1] %vm292, -inf
          %294 = vst.msk [vmem:[#allocation2 + $0x1] sm:$0x1] %vm292, -inf
          %295 = vst.msk [vmem:[#allocation2 + $0x2] sm:$0x1] %vm292, -inf
          %296 = vst.msk [vmem:[#allocation2 + $0x3] sm:$0x1] %vm292, -inf
          %297 = vst.msk [vmem:[#allocation3] sm:$0x1] %vm292, 0.0
          %298 = vst.msk [vmem:[#allocation3 + $0x1] sm:$0x1] %vm292, 0.0
          %299 = vst.msk [vmem:[#allocation3 + $0x2] sm:$0x1] %vm292, 0.0
          %300 = vst.msk [vmem:[#allocation3 + $0x3] sm:$0x1] %vm292, 0.0
          %vm301 = vcmask 523264
          %302 = vst.msk [vmem:[#allocation4] sm:$0xff] %vm301, 0.0
          %303 = vst.msk [vmem:[#allocation4 + $0x8] sm:$0xff] %vm301, 0.0
          %304 = vst.msk [vmem:[#allocation4 + $0x10] sm:$0xff] %vm301, 0.0
          %305 = vst.msk [vmem:[#allocation4 + $0x18] sm:$0xff] %vm301, 0.0
        $region48: #{tpu_custom_call.1} parent=31 // pred_fallthru
          _
        %v306 = vld [vmem:[%s233] sm:$0xff]
        %v307 = vld [vmem:[%s233 + $0x8] sm:$0xff]
        %v308 = vld [vmem:[%s233 + $0x10] sm:$0xff]
        %v309 = vld [vmem:[%s233 + $0x18] sm:$0xff]
        %v310 = vld [vmem:[%s242] sm:$0xff]
        %v311 = vld [vmem:[%s242 + $0x8] sm:$0xff]
        %v312 = vld [vmem:[%s242 + $0x10] sm:$0xff]
        %v313 = vld [vmem:[%s242 + $0x18] sm:$0xff]
        %v314 = vmul.f32 %v310, 0.35355338
        %v315 = vmul.f32 %v311, 0.35355338
        %v316 = vmul.f32 %v312, 0.35355338
        %v317 = vmul.f32 %v313, 0.35355338
        %v318 = vld [vmem:[%s251] sm:$0xff]
        %v319 = vld [vmem:[%s251 + $0x8] sm:$0xff]
        %v320 = vld [vmem:[%s251 + $0x10] sm:$0xff]
        %v321 = vld [vmem:[%s251 + $0x18] sm:$0xff]
        %322 = vxpose.xlu0.b32.start [1/16] %v314, 128
        %323 = vxpose.xlu0.b32.cont [2/16] 0.0, 128
        %324 = vxpose.xlu0.b32.cont [3/16] 0.0, 128
        %325 = vxpose.xlu0.b32.cont [4/16] 0.0, 128
        %326 = vxpose.xlu0.b32.cont [5/16] 0.0, 128
        %327 = vxpose.xlu0.b32.cont [6/16] 0.0, 128
        %328 = vxpose.xlu0.b32.cont [7/16] 0.0, 128
        %329 = vxpose.xlu0.b32.cont [8/16] 0.0, 128
        %330 = vxpose.xlu0.b32.cont [9/16] 0.0, 128
        %331 = vxpose.xlu0.b32.cont [10/16] 0.0, 128
        %332 = vxpose.xlu0.b32.cont [11/16] 0.0, 128
        %333 = vxpose.xlu0.b32.cont [12/16] 0.0, 128
        %334 = vxpose.xlu0.b32.cont [13/16] 0.0, 128
        %335 = vxpose.xlu0.b32.cont [14/16] 0.0, 128
        %336 = vxpose.xlu0.b32.cont [15/16] 0.0, 128
        %337 = vxpose.xlu0.b32.end [16/16] 0.0, 128
        %v338 = vpop.trf.xlu0
        %v339 = vpop.trf.xlu0
        %v340 = vpop.trf.xlu0
        %v341 = vpop.trf.xlu0
        %v342 = vpop.trf.xlu0
        %v343 = vpop.trf.xlu0
        %v344 = vpop.trf.xlu0
        %v345 = vpop.trf.xlu0
        %v346 = vpop.trf.xlu0
        %v347 = vpop.trf.xlu0
        %v348 = vpop.trf.xlu0
        %v349 = vpop.trf.xlu0
        %v350 = vpop.trf.xlu0
        %v351 = vpop.trf.xlu0
        %v352 = vpop.trf.xlu0
        %v353 = vpop.trf.xlu0
        %vm354 = vcmask 64512
        %v356 = vsel %vm354, %v338, 0
        %v359 = vsel %vm354, %v339, 0
        %v362 = vsel %vm354, %v340, 0
        %v365 = vsel %vm354, %v341, 0
        %v368 = vsel %vm354, %v342, 0
        %v371 = vsel %vm354, %v343, 0
        %v374 = vsel %vm354, %v344, 0
        %v377 = vsel %vm354, %v345, 0
        %379 = vmatprep.subr.mxu0 0.0
        %380 = vmatpush1.msra.mxu0 0.0
        %381 = vmatprep.subr.mxu0 0.0
        %382 = vmatpush1.msra.mxu0 0.0
        %383 = vmatprep.subr.mxu0 0.0
        %384 = vmatpush1.msra.mxu0 0.0
        %385 = vmatprep.subr.mxu0 0.0
        %386 = vmatpush1.msra.mxu0 0.0
        %387 = vmatprep.subr.mxu0 0.0
        %388 = vmatpush1.msra.mxu0 0.0
        %389 = vmatprep.subr.mxu0 0.0
        %390 = vmatpush1.msra.mxu0 0.0
        %391 = vmatprep.subr.mxu0 0.0
        %392 = vmatpush1.msra.mxu0 0.0
        %393 = vmatprep.subr.mxu0 0.0
        %394 = vmatpush1.msra.mxu0 0.0
        %395 = vmatprep.subr.mxu0 0.0
        %396 = vmatpush1.msra.mxu0 0.0
        %397 = vmatprep.subr.mxu0 0.0
        %398 = vmatpush1.msra.mxu0 0.0
        %399 = vmatprep.subr.mxu0 0.0
        %400 = vmatpush1.msra.mxu0 0.0
        %401 = vmatprep.subr.mxu0 0.0
        %402 = vmatpush1.msra.mxu0 0.0
        %403 = vmatprep.subr.mxu0 0.0
        %404 = vmatpush1.msra.mxu0 0.0
        %405 = vmatprep.subr.mxu0 0.0
        %406 = vmatpush1.msra.mxu0 0.0
        %407 = vmatprep.subr.mxu0 0.0
        %408 = vmatpush1.msra.mxu0 0.0
        %409 = vmatprep.subr.mxu0 0.0
        %410 = vmatpush1.msra.mxu0 %v306
        %411 = vmatprep.subr.mxu0 0.0
        %412 = vmatpush2.msra.mxu0 0.0
        %413 = vmatprep.subr.mxu0 0.0
        %414 = vmatpush2.msra.mxu0 0.0
        %415 = vmatprep.subr.mxu0 0.0
        %416 = vmatpush2.msra.mxu0 0.0
        %417 = vmatprep.subr.mxu0 0.0
        %418 = vmatpush2.msra.mxu0 0.0
        %419 = vmatprep.subr.mxu0 0.0
        %420 = vmatpush2.msra.mxu0 0.0
        %421 = vmatprep.subr.mxu0 0.0
        %422 = vmatpush2.msra.mxu0 0.0
        %423 = vmatprep.subr.mxu0 0.0
        %424 = vmatpush2.msra.mxu0 0.0
        %425 = vmatprep.subr.mxu0 0.0
        %426 = vmatpush2.msra.mxu0 0.0
        %427 = vmatprep.subr.mxu0 0.0
        %428 = vmatpush2.msra.mxu0 0.0
        %429 = vmatprep.subr.mxu0 0.0
        %430 = vmatpush2.msra.mxu0 0.0
        %431 = vmatprep.subr.mxu0 0.0
        %432 = vmatpush2.msra.mxu0 0.0
        %433 = vmatprep.subr.mxu0 0.0
        %434 = vmatpush2.msra.mxu0 0.0
        %435 = vmatprep.subr.mxu0 0.0
        %436 = vmatpush2.msra.mxu0 0.0
        %437 = vmatprep.subr.mxu0 0.0
        %438 = vmatpush2.msra.mxu0 0.0
        %439 = vmatprep.subr.mxu0 0.0
        %440 = vmatpush2.msra.mxu0 0.0
        %441 = vmatprep.subr.mxu0 0.0
        %442 = vmatpush2.msra.mxu0 0.0
        %443 = vmatprep.mubr.f32.mxu0 0.0
        %444 = vmatmul.mubr.f32.gmra.mxu0 %v356
        %v445 = vpop.f32.mrf.mxu0
        %v446 = vadd.f32 0.0, %v445
        %v447 = vpop.f32.mrf.mxu0
        %448 = vmatprep.mubr.f32.mxu0 0.0
        %449 = vmatmul.mubr.f32.gmra.mxu0 %v359
        %v450 = vpop.f32.mrf.mxu0
        %v451 = vadd.f32 0.0, %v450
        %v452 = vpop.f32.mrf.mxu0
        %453 = vmatprep.mubr.f32.mxu0 0.0
        %454 = vmatmul.mubr.f32.gmra.mxu0 %v362
        %v455 = vpop.f32.mrf.mxu0
        %v456 = vadd.f32 0.0, %v455
        %v457 = vpop.f32.mrf.mxu0
        %458 = vmatprep.mubr.f32.mxu0 0.0
        %459 = vmatmul.mubr.f32.gmra.mxu0 %v365
        %v460 = vpop.f32.mrf.mxu0
        %v461 = vadd.f32 0.0, %v460
        %v462 = vpop.f32.mrf.mxu0
        %463 = vmatprep.mubr.f32.mxu0 0.0
        %464 = vmatmul.mubr.f32.gmra.mxu0 %v368
        %v465 = vpop.f32.mrf.mxu0
        %v466 = vadd.f32 0.0, %v465
        %v467 = vpop.f32.mrf.mxu0
        %468 = vmatprep.mubr.f32.mxu0 0.0
        %469 = vmatmul.mubr.f32.gmra.mxu0 %v371
        %v470 = vpop.f32.mrf.mxu0
        %v471 = vadd.f32 0.0, %v470
        %v472 = vpop.f32.mrf.mxu0
        %473 = vmatprep.mubr.f32.mxu0 0.0
        %474 = vmatmul.mubr.f32.gmra.mxu0 %v374
        %v475 = vpop.f32.mrf.mxu0
        %v476 = vadd.f32 0.0, %v475
        %v477 = vpop.f32.mrf.mxu0
        %478 = vmatprep.mubr.f32.mxu0 0.0
        %479 = vmatmul.mubr.f32.gmra.mxu0 %v377
        %v480 = vpop.f32.mrf.mxu0
        %v481 = vadd.f32 0.0, %v480
        %v482 = vpop.f32.mrf.mxu0
        %483 = vdwg.mxu0
        %484 = vxpose.xlu0.b32.start [1/16] %v315, 128
        %485 = vxpose.xlu0.b32.cont [2/16] 0.0, 128
        %486 = vxpose.xlu0.b32.cont [3/16] 0.0, 128
        %487 = vxpose.xlu0.b32.cont [4/16] 0.0, 128
        %488 = vxpose.xlu0.b32.cont [5/16] 0.0, 128
        %489 = vxpose.xlu0.b32.cont [6/16] 0.0, 128
        %490 = vxpose.xlu0.b32.cont [7/16] 0.0, 128
        %491 = vxpose.xlu0.b32.cont [8/16] 0.0, 128
        %492 = vxpose.xlu0.b32.cont [9/16] 0.0, 128
        %493 = vxpose.xlu0.b32.cont [10/16] 0.0, 128
        %494 = vxpose.xlu0.b32.cont [11/16] 0.0, 128
        %495 = vxpose.xlu0.b32.cont [12/16] 0.0, 128
        %496 = vxpose.xlu0.b32.cont [13/16] 0.0, 128
        %497 = vxpose.xlu0.b32.cont [14/16] 0.0, 128
        %498 = vxpose.xlu0.b32.cont [15/16] 0.0, 128
        %499 = vxpose.xlu0.b32.end [16/16] 0.0, 128
        %v500 = vpop.trf.xlu0
        %v501 = vpop.trf.xlu0
        %v502 = vpop.trf.xlu0
        %v503 = vpop.trf.xlu0
        %v504 = vpop.trf.xlu0
        %v505 = vpop.trf.xlu0
        %v506 = vpop.trf.xlu0
        %v507 = vpop.trf.xlu0
        %v508 = vpop.trf.xlu0
        %v509 = vpop.trf.xlu0
        %v510 = vpop.trf.xlu0
        %v511 = vpop.trf.xlu0
        %v512 = vpop.trf.xlu0
        %v513 = vpop.trf.xlu0
        %v514 = vpop.trf.xlu0
        %v515 = vpop.trf.xlu0
        %v517 = vsel %vm354, %v500, 0
        %v520 = vsel %vm354, %v501, 0
        %v523 = vsel %vm354, %v502, 0
        %v526 = vsel %vm354, %v503, 0
        %v529 = vsel %vm354, %v504, 0
        %v532 = vsel %vm354, %v505, 0
        %v535 = vsel %vm354, %v506, 0
        %v538 = vsel %vm354, %v507, 0
        %540 = vmatprep.subr.mxu0 0.0
        %541 = vmatpush1.msra.mxu0 0.0
        %542 = vmatprep.subr.mxu0 0.0
        %543 = vmatpush1.msra.mxu0 0.0
        %544 = vmatprep.subr.mxu0 0.0
        %545 = vmatpush1.msra.mxu0 0.0
        %546 = vmatprep.subr.mxu0 0.0
        %547 = vmatpush1.msra.mxu0 0.0
        %548 = vmatprep.subr.mxu0 0.0
        %549 = vmatpush1.msra.mxu0 0.0
        %550 = vmatprep.subr.mxu0 0.0
        %551 = vmatpush1.msra.mxu0 0.0
        %552 = vmatprep.subr.mxu0 0.0
        %553 = vmatpush1.msra.mxu0 0.0
        %554 = vmatprep.subr.mxu0 0.0
        %555 = vmatpush1.msra.mxu0 0.0
        %556 = vmatprep.subr.mxu0 0.0
        %557 = vmatpush1.msra.mxu0 0.0
        %558 = vmatprep.subr.mxu0 0.0
        %559 = vmatpush1.msra.mxu0 0.0
        %560 = vmatprep.subr.mxu0 0.0
        %561 = vmatpush1.msra.mxu0 0.0
        %562 = vmatprep.subr.mxu0 0.0
        %563 = vmatpush1.msra.mxu0 0.0
        %564 = vmatprep.subr.mxu0 0.0
        %565 = vmatpush1.msra.mxu0 0.0
        %566 = vmatprep.subr.mxu0 0.0
        %567 = vmatpush1.msra.mxu0 0.0
        %568 = vmatprep.subr.mxu0 0.0
        %569 = vmatpush1.msra.mxu0 0.0
        %570 = vmatprep.subr.mxu0 0.0
        %571 = vmatpush1.msra.mxu0 %v307
        %572 = vmatprep.subr.mxu0 0.0
        %573 = vmatpush2.msra.mxu0 0.0
        %574 = vmatprep.subr.mxu0 0.0
        %575 = vmatpush2.msra.mxu0 0.0
        %576 = vmatprep.subr.mxu0 0.0
        %577 = vmatpush2.msra.mxu0 0.0
        %578 = vmatprep.subr.mxu0 0.0
        %579 = vmatpush2.msra.mxu0 0.0
        %580 = vmatprep.subr.mxu0 0.0
        %581 = vmatpush2.msra.mxu0 0.0
        %582 = vmatprep.subr.mxu0 0.0
        %583 = vmatpush2.msra.mxu0 0.0
        %584 = vmatprep.subr.mxu0 0.0
        %585 = vmatpush2.msra.mxu0 0.0
        %586 = vmatprep.subr.mxu0 0.0
        %587 = vmatpush2.msra.mxu0 0.0
        %588 = vmatprep.subr.mxu0 0.0
        %589 = vmatpush2.msra.mxu0 0.0
        %590 = vmatprep.subr.mxu0 0.0
        %591 = vmatpush2.msra.mxu0 0.0
        %592 = vmatprep.subr.mxu0 0.0
        %593 = vmatpush2.msra.mxu0 0.0
        %594 = vmatprep.subr.mxu0 0.0
        %595 = vmatpush2.msra.mxu0 0.0
        %596 = vmatprep.subr.mxu0 0.0
        %597 = vmatpush2.msra.mxu0 0.0
        %598 = vmatprep.subr.mxu0 0.0
        %599 = vmatpush2.msra.mxu0 0.0
        %600 = vmatprep.subr.mxu0 0.0
        %601 = vmatpush2.msra.mxu0 0.0
        %602 = vmatprep.subr.mxu0 0.0
        %603 = vmatpush2.msra.mxu0 0.0
        %604 = vmatprep.mubr.f32.mxu0 0.0
        %605 = vmatmul.mubr.f32.gmra.mxu0 %v517
        %v606 = vpop.f32.mrf.mxu0
        %v607 = vadd.f32 0.0, %v606
        %v608 = vpop.f32.mrf.mxu0
        %609 = vmatprep.mubr.f32.mxu0 0.0
        %610 = vmatmul.mubr.f32.gmra.mxu0 %v520
        %v611 = vpop.f32.mrf.mxu0
        %v612 = vadd.f32 0.0, %v611
        %v613 = vpop.f32.mrf.mxu0
        %614 = vmatprep.mubr.f32.mxu0 0.0
        %615 = vmatmul.mubr.f32.gmra.mxu0 %v523
        %v616 = vpop.f32.mrf.mxu0
        %v617 = vadd.f32 0.0, %v616
        %v618 = vpop.f32.mrf.mxu0
        %619 = vmatprep.mubr.f32.mxu0 0.0
        %620 = vmatmul.mubr.f32.gmra.mxu0 %v526
        %v621 = vpop.f32.mrf.mxu0
        %v622 = vadd.f32 0.0, %v621
        %v623 = vpop.f32.mrf.mxu0
        %624 = vmatprep.mubr.f32.mxu0 0.0
        %625 = vmatmul.mubr.f32.gmra.mxu0 %v529
        %v626 = vpop.f32.mrf.mxu0
        %v627 = vadd.f32 0.0, %v626
        %v628 = vpop.f32.mrf.mxu0
        %629 = vmatprep.mubr.f32.mxu0 0.0
        %630 = vmatmul.mubr.f32.gmra.mxu0 %v532
        %v631 = vpop.f32.mrf.mxu0
        %v632 = vadd.f32 0.0, %v631
        %v633 = vpop.f32.mrf.mxu0
        %634 = vmatprep.mubr.f32.mxu0 0.0
        %635 = vmatmul.mubr.f32.gmra.mxu0 %v535
        %v636 = vpop.f32.mrf.mxu0
        %v637 = vadd.f32 0.0, %v636
        %v638 = vpop.f32.mrf.mxu0
        %639 = vmatprep.mubr.f32.mxu0 0.0
        %640 = vmatmul.mubr.f32.gmra.mxu0 %v538
        %v641 = vpop.f32.mrf.mxu0
        %v642 = vadd.f32 0.0, %v641
        %v643 = vpop.f32.mrf.mxu0
        %644 = vdwg.mxu0
        %645 = vxpose.xlu0.b32.start [1/16] %v316, 128
        %646 = vxpose.xlu0.b32.cont [2/16] 0.0, 128
        %647 = vxpose.xlu0.b32.cont [3/16] 0.0, 128
        %648 = vxpose.xlu0.b32.cont [4/16] 0.0, 128
        %649 = vxpose.xlu0.b32.cont [5/16] 0.0, 128
        %650 = vxpose.xlu0.b32.cont [6/16] 0.0, 128
        %651 = vxpose.xlu0.b32.cont [7/16] 0.0, 128
        %652 = vxpose.xlu0.b32.cont [8/16] 0.0, 128
        %653 = vxpose.xlu0.b32.cont [9/16] 0.0, 128
        %654 = vxpose.xlu0.b32.cont [10/16] 0.0, 128
        %655 = vxpose.xlu0.b32.cont [11/16] 0.0, 128
        %656 = vxpose.xlu0.b32.cont [12/16] 0.0, 128
        %657 = vxpose.xlu0.b32.cont [13/16] 0.0, 128
        %658 = vxpose.xlu0.b32.cont [14/16] 0.0, 128
        %659 = vxpose.xlu0.b32.cont [15/16] 0.0, 128
        %660 = vxpose.xlu0.b32.end [16/16] 0.0, 128
        %v661 = vpop.trf.xlu0
        %v662 = vpop.trf.xlu0
        %v663 = vpop.trf.xlu0
        %v664 = vpop.trf.xlu0
        %v665 = vpop.trf.xlu0
        %v666 = vpop.trf.xlu0
        %v667 = vpop.trf.xlu0
        %v668 = vpop.trf.xlu0
        %v669 = vpop.trf.xlu0
        %v670 = vpop.trf.xlu0
        %v671 = vpop.trf.xlu0
        %v672 = vpop.trf.xlu0
        %v673 = vpop.trf.xlu0
        %v674 = vpop.trf.xlu0
        %v675 = vpop.trf.xlu0
        %v676 = vpop.trf.xlu0
        %v678 = vsel %vm354, %v661, 0
        %v681 = vsel %vm354, %v662, 0
        %v684 = vsel %vm354, %v663, 0
        %v687 = vsel %vm354, %v664, 0
        %v690 = vsel %vm354, %v665, 0
        %v693 = vsel %vm354, %v666, 0
        %v696 = vsel %vm354, %v667, 0
        %v699 = vsel %vm354, %v668, 0
        %701 = vmatprep.subr.mxu0 0.0
        %702 = vmatpush1.msra.mxu0 0.0
        %703 = vmatprep.subr.mxu0 0.0
        %704 = vmatpush1.msra.mxu0 0.0
        %705 = vmatprep.subr.mxu0 0.0
        %706 = vmatpush1.msra.mxu0 0.0
        %707 = vmatprep.subr.mxu0 0.0
        %708 = vmatpush1.msra.mxu0 0.0
        %709 = vmatprep.subr.mxu0 0.0
        %710 = vmatpush1.msra.mxu0 0.0
        %711 = vmatprep.subr.mxu0 0.0
        %712 = vmatpush1.msra.mxu0 0.0
        %713 = vmatprep.subr.mxu0 0.0
        %714 = vmatpush1.msra.mxu0 0.0
        %715 = vmatprep.subr.mxu0 0.0
        %716 = vmatpush1.msra.mxu0 0.0
        %717 = vmatprep.subr.mxu0 0.0
        %718 = vmatpush1.msra.mxu0 0.0
        %719 = vmatprep.subr.mxu0 0.0
        %720 = vmatpush1.msra.mxu0 0.0
        %721 = vmatprep.subr.mxu0 0.0
        %722 = vmatpush1.msra.mxu0 0.0
        %723 = vmatprep.subr.mxu0 0.0
        %724 = vmatpush1.msra.mxu0 0.0
        %725 = vmatprep.subr.mxu0 0.0
        %726 = vmatpush1.msra.mxu0 0.0
        %727 = vmatprep.subr.mxu0 0.0
        %728 = vmatpush1.msra.mxu0 0.0
        %729 = vmatprep.subr.mxu0 0.0
        %730 = vmatpush1.msra.mxu0 0.0
        %731 = vmatprep.subr.mxu0 0.0
        %732 = vmatpush1.msra.mxu0 %v308
        %733 = vmatprep.subr.mxu0 0.0
        %734 = vmatpush2.msra.mxu0 0.0
        %735 = vmatprep.subr.mxu0 0.0
        %736 = vmatpush2.msra.mxu0 0.0
        %737 = vmatprep.subr.mxu0 0.0
        %738 = vmatpush2.msra.mxu0 0.0
        %739 = vmatprep.subr.mxu0 0.0
        %740 = vmatpush2.msra.mxu0 0.0
        %741 = vmatprep.subr.mxu0 0.0
        %742 = vmatpush2.msra.mxu0 0.0
        %743 = vmatprep.subr.mxu0 0.0
        %744 = vmatpush2.msra.mxu0 0.0
        %745 = vmatprep.subr.mxu0 0.0
        %746 = vmatpush2.msra.mxu0 0.0
        %747 = vmatprep.subr.mxu0 0.0
        %748 = vmatpush2.msra.mxu0 0.0
        %749 = vmatprep.subr.mxu0 0.0
        %750 = vmatpush2.msra.mxu0 0.0
        %751 = vmatprep.subr.mxu0 0.0
        %752 = vmatpush2.msra.mxu0 0.0
        %753 = vmatprep.subr.mxu0 0.0
        %754 = vmatpush2.msra.mxu0 0.0
        %755 = vmatprep.subr.mxu0 0.0
        %756 = vmatpush2.msra.mxu0 0.0
        %757 = vmatprep.subr.mxu0 0.0
        %758 = vmatpush2.msra.mxu0 0.0
        %759 = vmatprep.subr.mxu0 0.0
        %760 = vmatpush2.msra.mxu0 0.0
        %761 = vmatprep.subr.mxu0 0.0
        %762 = vmatpush2.msra.mxu0 0.0
        %763 = vmatprep.subr.mxu0 0.0
        %764 = vmatpush2.msra.mxu0 0.0
        %765 = vmatprep.mubr.f32.mxu0 0.0
        %766 = vmatmul.mubr.f32.gmra.mxu0 %v678
        %v767 = vpop.f32.mrf.mxu0
        %v768 = vadd.f32 0.0, %v767
        %v769 = vpop.f32.mrf.mxu0
        %770 = vmatprep.mubr.f32.mxu0 0.0
        %771 = vmatmul.mubr.f32.gmra.mxu0 %v681
        %v772 = vpop.f32.mrf.mxu0
        %v773 = vadd.f32 0.0, %v772
        %v774 = vpop.f32.mrf.mxu0
        %775 = vmatprep.mubr.f32.mxu0 0.0
        %776 = vmatmul.mubr.f32.gmra.mxu0 %v684
        %v777 = vpop.f32.mrf.mxu0
        %v778 = vadd.f32 0.0, %v777
        %v779 = vpop.f32.mrf.mxu0
        %780 = vmatprep.mubr.f32.mxu0 0.0
        %781 = vmatmul.mubr.f32.gmra.mxu0 %v687
        %v782 = vpop.f32.mrf.mxu0
        %v783 = vadd.f32 0.0, %v782
        %v784 = vpop.f32.mrf.mxu0
        %785 = vmatprep.mubr.f32.mxu0 0.0
        %786 = vmatmul.mubr.f32.gmra.mxu0 %v690
        %v787 = vpop.f32.mrf.mxu0
        %v788 = vadd.f32 0.0, %v787
        %v789 = vpop.f32.mrf.mxu0
        %790 = vmatprep.mubr.f32.mxu0 0.0
        %791 = vmatmul.mubr.f32.gmra.mxu0 %v693
        %v792 = vpop.f32.mrf.mxu0
        %v793 = vadd.f32 0.0, %v792
        %v794 = vpop.f32.mrf.mxu0
        %795 = vmatprep.mubr.f32.mxu0 0.0
        %796 = vmatmul.mubr.f32.gmra.mxu0 %v696
        %v797 = vpop.f32.mrf.mxu0
        %v798 = vadd.f32 0.0, %v797
        %v799 = vpop.f32.mrf.mxu0
        %800 = vmatprep.mubr.f32.mxu0 0.0
        %801 = vmatmul.mubr.f32.gmra.mxu0 %v699
        %v802 = vpop.f32.mrf.mxu0
        %v803 = vadd.f32 0.0, %v802
        %v804 = vpop.f32.mrf.mxu0
        %805 = vdwg.mxu0
        %806 = vxpose.xlu0.b32.start [1/16] %v317, 128
        %807 = vxpose.xlu0.b32.cont [2/16] 0.0, 128
        %808 = vxpose.xlu0.b32.cont [3/16] 0.0, 128
        %809 = vxpose.xlu0.b32.cont [4/16] 0.0, 128
        %810 = vxpose.xlu0.b32.cont [5/16] 0.0, 128
        %811 = vxpose.xlu0.b32.cont [6/16] 0.0, 128
        %812 = vxpose.xlu0.b32.cont [7/16] 0.0, 128
        %813 = vxpose.xlu0.b32.cont [8/16] 0.0, 128
        %814 = vxpose.xlu0.b32.cont [9/16] 0.0, 128
        %815 = vxpose.xlu0.b32.cont [10/16] 0.0, 128
        %816 = vxpose.xlu0.b32.cont [11/16] 0.0, 128
        %817 = vxpose.xlu0.b32.cont [12/16] 0.0, 128
        %818 = vxpose.xlu0.b32.cont [13/16] 0.0, 128
        %819 = vxpose.xlu0.b32.cont [14/16] 0.0, 128
        %820 = vxpose.xlu0.b32.cont [15/16] 0.0, 128
        %821 = vxpose.xlu0.b32.end [16/16] 0.0, 128
        %v822 = vpop.trf.xlu0
        %v823 = vpop.trf.xlu0
        %v824 = vpop.trf.xlu0
        %v825 = vpop.trf.xlu0
        %v826 = vpop.trf.xlu0
        %v827 = vpop.trf.xlu0
        %v828 = vpop.trf.xlu0
        %v829 = vpop.trf.xlu0
        %v830 = vpop.trf.xlu0
        %v831 = vpop.trf.xlu0
        %v832 = vpop.trf.xlu0
        %v833 = vpop.trf.xlu0
        %v834 = vpop.trf.xlu0
        %v835 = vpop.trf.xlu0
        %v836 = vpop.trf.xlu0
        %v837 = vpop.trf.xlu0
        %v839 = vsel %vm354, %v822, 0
        %v842 = vsel %vm354, %v823, 0
        %v845 = vsel %vm354, %v824, 0
        %v848 = vsel %vm354, %v825, 0
        %v851 = vsel %vm354, %v826, 0
        %v854 = vsel %vm354, %v827, 0
        %v857 = vsel %vm354, %v828, 0
        %v860 = vsel %vm354, %v829, 0
        %862 = vmatprep.subr.mxu0 0.0
        %863 = vmatpush1.msra.mxu0 0.0
        %864 = vmatprep.subr.mxu0 0.0
        %865 = vmatpush1.msra.mxu0 0.0
        %866 = vmatprep.subr.mxu0 0.0
        %867 = vmatpush1.msra.mxu0 0.0
        %868 = vmatprep.subr.mxu0 0.0
        %869 = vmatpush1.msra.mxu0 0.0
        %870 = vmatprep.subr.mxu0 0.0
        %871 = vmatpush1.msra.mxu0 0.0
        %872 = vmatprep.subr.mxu0 0.0
        %873 = vmatpush1.msra.mxu0 0.0
        %874 = vmatprep.subr.mxu0 0.0
        %875 = vmatpush1.msra.mxu0 0.0
        %876 = vmatprep.subr.mxu0 0.0
        %877 = vmatpush1.msra.mxu0 0.0
        %878 = vmatprep.subr.mxu0 0.0
        %879 = vmatpush1.msra.mxu0 0.0
        %880 = vmatprep.subr.mxu0 0.0
        %881 = vmatpush1.msra.mxu0 0.0
        %882 = vmatprep.subr.mxu0 0.0
        %883 = vmatpush1.msra.mxu0 0.0
        %884 = vmatprep.subr.mxu0 0.0
        %885 = vmatpush1.msra.mxu0 0.0
        %886 = vmatprep.subr.mxu0 0.0
        %887 = vmatpush1.msra.mxu0 0.0
        %888 = vmatprep.subr.mxu0 0.0
        %889 = vmatpush1.msra.mxu0 0.0
        %890 = vmatprep.subr.mxu0 0.0
        %891 = vmatpush1.msra.mxu0 0.0
        %892 = vmatprep.subr.mxu0 0.0
        %893 = vmatpush1.msra.mxu0 %v309
        %894 = vmatprep.subr.mxu0 0.0
        %895 = vmatpush2.msra.mxu0 0.0
        %896 = vmatprep.subr.mxu0 0.0
        %897 = vmatpush2.msra.mxu0 0.0
        %898 = vmatprep.subr.mxu0 0.0
        %899 = vmatpush2.msra.mxu0 0.0
        %900 = vmatprep.subr.mxu0 0.0
        %901 = vmatpush2.msra.mxu0 0.0
        %902 = vmatprep.subr.mxu0 0.0
        %903 = vmatpush2.msra.mxu0 0.0
        %904 = vmatprep.subr.mxu0 0.0
        %905 = vmatpush2.msra.mxu0 0.0
        %906 = vmatprep.subr.mxu0 0.0
        %907 = vmatpush2.msra.mxu0 0.0
        %908 = vmatprep.subr.mxu0 0.0
        %909 = vmatpush2.msra.mxu0 0.0
        %910 = vmatprep.subr.mxu0 0.0
        %911 = vmatpush2.msra.mxu0 0.0
        %912 = vmatprep.subr.mxu0 0.0
        %913 = vmatpush2.msra.mxu0 0.0
        %914 = vmatprep.subr.mxu0 0.0
        %915 = vmatpush2.msra.mxu0 0.0
        %916 = vmatprep.subr.mxu0 0.0
        %917 = vmatpush2.msra.mxu0 0.0
        %918 = vmatprep.subr.mxu0 0.0
        %919 = vmatpush2.msra.mxu0 0.0
        %920 = vmatprep.subr.mxu0 0.0
        %921 = vmatpush2.msra.mxu0 0.0
        %922 = vmatprep.subr.mxu0 0.0
        %923 = vmatpush2.msra.mxu0 0.0
        %924 = vmatprep.subr.mxu0 0.0
        %925 = vmatpush2.msra.mxu0 0.0
        %926 = vmatprep.mubr.f32.mxu0 0.0
        %927 = vmatmul.mubr.f32.gmra.mxu0 %v839
        %v928 = vpop.f32.mrf.mxu0
        %v929 = vadd.f32 0.0, %v928
        %v930 = vpop.f32.mrf.mxu0
        %931 = vmatprep.mubr.f32.mxu0 0.0
        %932 = vmatmul.mubr.f32.gmra.mxu0 %v842
        %v933 = vpop.f32.mrf.mxu0
        %v934 = vadd.f32 0.0, %v933
        %v935 = vpop.f32.mrf.mxu0
        %936 = vmatprep.mubr.f32.mxu0 0.0
        %937 = vmatmul.mubr.f32.gmra.mxu0 %v845
        %v938 = vpop.f32.mrf.mxu0
        %v939 = vadd.f32 0.0, %v938
        %v940 = vpop.f32.mrf.mxu0
        %941 = vmatprep.mubr.f32.mxu0 0.0
        %942 = vmatmul.mubr.f32.gmra.mxu0 %v848
        %v943 = vpop.f32.mrf.mxu0
        %v944 = vadd.f32 0.0, %v943
        %v945 = vpop.f32.mrf.mxu0
        %946 = vmatprep.mubr.f32.mxu0 0.0
        %947 = vmatmul.mubr.f32.gmra.mxu0 %v851
        %v948 = vpop.f32.mrf.mxu0
        %v949 = vadd.f32 0.0, %v948
        %v950 = vpop.f32.mrf.mxu0
        %951 = vmatprep.mubr.f32.mxu0 0.0
        %952 = vmatmul.mubr.f32.gmra.mxu0 %v854
        %v953 = vpop.f32.mrf.mxu0
        %v954 = vadd.f32 0.0, %v953
        %v955 = vpop.f32.mrf.mxu0
        %956 = vmatprep.mubr.f32.mxu0 0.0
        %957 = vmatmul.mubr.f32.gmra.mxu0 %v857
        %v958 = vpop.f32.mrf.mxu0
        %v959 = vadd.f32 0.0, %v958
        %v960 = vpop.f32.mrf.mxu0
        %961 = vmatprep.mubr.f32.mxu0 0.0
        %962 = vmatmul.mubr.f32.gmra.mxu0 %v860
        %v963 = vpop.f32.mrf.mxu0
        %v964 = vadd.f32 0.0, %v963
        %v965 = vpop.f32.mrf.mxu0
        %966 = vdwg.mxu0
        %v967 = vld [vmem:[#allocation2] sm:$0x1]
        %v968 = vld [vmem:[#allocation2 + $0x1] sm:$0x1]
        %v969 = vld [vmem:[#allocation2 + $0x2] sm:$0x1]
        %v970 = vld [vmem:[#allocation2 + $0x3] sm:$0x1]
        %vm971 = vcmask 523264
        %v972 = vsel %vm971, %v446, -inf
        %v973 = vsel %vm971, %v451, -inf
        %v974 = vmax.f32 %v972, %v973
        %v975 = vsel %vm971, %v456, -inf
        %v976 = vmax.f32 %v974, %v975
        %v977 = vsel %vm971, %v461, -inf
        %v978 = vmax.f32 %v976, %v977
        %v979 = vsel %vm971, %v466, -inf
        %v980 = vmax.f32 %v978, %v979
        %v981 = vsel %vm971, %v471, -inf
        %v982 = vmax.f32 %v980, %v981
        %v983 = vsel %vm971, %v476, -inf
        %v984 = vmax.f32 %v982, %v983
        %v985 = vsel %vm971, %v481, -inf
        %v986 = vmax.f32 %v984, %v985
        %v987 = vrot.slane %v986, 4
        %v988 = vmax.f32 %v986, %v987
        %v989 = vrot.slane %v988, 2
        %v990 = vmax.f32 %v988, %v989
        %v991 = vrot.slane %v990, 1
        %v992 = vmax.f32 %v990, %v991
        %v993 = vsel %vm971, %v607, -inf
        %v994 = vsel %vm971, %v612, -inf
        %v995 = vmax.f32 %v993, %v994
        %v996 = vsel %vm971, %v617, -inf
        %v997 = vmax.f32 %v995, %v996
        %v998 = vsel %vm971, %v622, -inf
        %v999 = vmax.f32 %v997, %v998
        %v1000 = vsel %vm971, %v627, -inf
        %v1001 = vmax.f32 %v999, %v1000
        %v1002 = vsel %vm971, %v632, -inf
        %v1003 = vmax.f32 %v1001, %v1002
        %v1004 = vsel %vm971, %v637, -inf
        %v1005 = vmax.f32 %v1003, %v1004
        %v1006 = vsel %vm971, %v642, -inf
        %v1007 = vmax.f32 %v1005, %v1006
        %v1008 = vrot.slane %v1007, 4
        %v1009 = vmax.f32 %v1007, %v1008
        %v1010 = vrot.slane %v1009, 2
        %v1011 = vmax.f32 %v1009, %v1010
        %v1012 = vrot.slane %v1011, 1
        %v1013 = vmax.f32 %v1011, %v1012
        %v1014 = vsel %vm971, %v768, -inf
        %v1015 = vsel %vm971, %v773, -inf
        %v1016 = vmax.f32 %v1014, %v1015
        %v1017 = vsel %vm971, %v778, -inf
        %v1018 = vmax.f32 %v1016, %v1017
        %v1019 = vsel %vm971, %v783, -inf
        %v1020 = vmax.f32 %v1018, %v1019
        %v1021 = vsel %vm971, %v788, -inf
        %v1022 = vmax.f32 %v1020, %v1021
        %v1023 = vsel %vm971, %v793, -inf
        %v1024 = vmax.f32 %v1022, %v1023
        %v1025 = vsel %vm971, %v798, -inf
        %v1026 = vmax.f32 %v1024, %v1025
        %v1027 = vsel %vm971, %v803, -inf
        %v1028 = vmax.f32 %v1026, %v1027
        %v1029 = vrot.slane %v1028, 4
        %v1030 = vmax.f32 %v1028, %v1029
        %v1031 = vrot.slane %v1030, 2
        %v1032 = vmax.f32 %v1030, %v1031
        %v1033 = vrot.slane %v1032, 1
        %v1034 = vmax.f32 %v1032, %v1033
        %v1035 = vsel %vm971, %v929, -inf
        %v1036 = vsel %vm971, %v934, -inf
        %v1037 = vmax.f32 %v1035, %v1036
        %v1038 = vsel %vm971, %v939, -inf
        %v1039 = vmax.f32 %v1037, %v1038
        %v1040 = vsel %vm971, %v944, -inf
        %v1041 = vmax.f32 %v1039, %v1040
        %v1042 = vsel %vm971, %v949, -inf
        %v1043 = vmax.f32 %v1041, %v1042
        %v1044 = vsel %vm971, %v954, -inf
        %v1045 = vmax.f32 %v1043, %v1044
        %v1046 = vsel %vm971, %v959, -inf
        %v1047 = vmax.f32 %v1045, %v1046
        %v1048 = vsel %vm971, %v964, -inf
        %v1049 = vmax.f32 %v1047, %v1048
        %v1050 = vrot.slane %v1049, 4
        %v1051 = vmax.f32 %v1049, %v1050
        %v1052 = vrot.slane %v1051, 2
        %v1053 = vmax.f32 %v1051, %v1052
        %v1054 = vrot.slane %v1053, 1
        %v1055 = vmax.f32 %v1053, %v1054
        %v1056 = vmax.f32 %v967, %v992
        %v1057 = vmax.f32 %v968, %v1013
        %v1058 = vmax.f32 %v969, %v1034
        %v1059 = vmax.f32 %v970, %v1055
        %v1060 = vsub.f32 %v967, %v1056
        %v1061 = vsub.f32 %v968, %v1057
        %v1062 = vsub.f32 %v969, %v1058
        %v1063 = vsub.f32 %v970, %v1059
        %v1064 = vmul.f32 %v1060, 1.442695
        %v1065 = vpow.pop %v1064
        %v1066 = vmul.f32 %v1061, 1.442695
        %v1067 = vpow.pop %v1066
        %v1068 = vmul.f32 %v1062, 1.442695
        %v1069 = vpow.pop %v1068
        %v1070 = vmul.f32 %v1063, 1.442695
        %v1071 = vpow.pop %v1070
        %v1076 = vlaneseq
        %v1077 = vshrl.u32 %v1076, 7
        %v1078 = vsub.s32 0, %v1077
        %v1079 = vrot.slane %v1056, %v1078
        %v1080 = vlaneseq
        %v1081 = vshrl.u32 %v1080, 7
        %v1082 = vsub.s32 0, %v1081
        %v1083 = vrot.slane %v1057, %v1082
        %v1084 = vlaneseq
        %v1085 = vshrl.u32 %v1084, 7
        %v1086 = vsub.s32 0, %v1085
        %v1087 = vrot.slane %v1058, %v1086
        %v1088 = vlaneseq
        %v1089 = vshrl.u32 %v1088, 7
        %v1090 = vsub.s32 0, %v1089
        %v1091 = vrot.slane %v1059, %v1090
        %v1096 = vsub.f32 %v446, %v1079
        %v1097 = vsub.f32 %v451, %v1079
        %v1098 = vsub.f32 %v456, %v1079
        %v1099 = vsub.f32 %v461, %v1079
        %v1100 = vsub.f32 %v466, %v1079
        %v1101 = vsub.f32 %v471, %v1079
        %v1102 = vsub.f32 %v476, %v1079
        %v1103 = vsub.f32 %v481, %v1079
        %v1104 = vsub.f32 %v607, %v1083
        %v1105 = vsub.f32 %v612, %v1083
        %v1106 = vsub.f32 %v617, %v1083
        %v1107 = vsub.f32 %v622, %v1083
        %v1108 = vsub.f32 %v627, %v1083
        %v1109 = vsub.f32 %v632, %v1083
        %v1110 = vsub.f32 %v637, %v1083
        %v1111 = vsub.f32 %v642, %v1083
        %v1112 = vsub.f32 %v768, %v1087
        %v1113 = vsub.f32 %v773, %v1087
        %v1114 = vsub.f32 %v778, %v1087
        %v1115 = vsub.f32 %v783, %v1087
        %v1116 = vsub.f32 %v788, %v1087
        %v1117 = vsub.f32 %v793, %v1087
        %v1118 = vsub.f32 %v798, %v1087
        %v1119 = vsub.f32 %v803, %v1087
        %v1120 = vsub.f32 %v929, %v1091
        %v1121 = vsub.f32 %v934, %v1091
        %v1122 = vsub.f32 %v939, %v1091
        %v1123 = vsub.f32 %v944, %v1091
        %v1124 = vsub.f32 %v949, %v1091
        %v1125 = vsub.f32 %v954, %v1091
        %v1126 = vsub.f32 %v959, %v1091
        %v1127 = vsub.f32 %v964, %v1091
        %v1128 = vmul.f32 %v1096, 1.442695
        %v1129 = vpow.pop %v1128
        %v1130 = vmul.f32 %v1097, 1.442695
        %v1131 = vpow.pop %v1130
        %v1132 = vmul.f32 %v1098, 1.442695
        %v1133 = vpow.pop %v1132
        %v1134 = vmul.f32 %v1099, 1.442695
        %v1135 = vpow.pop %v1134
        %v1136 = vmul.f32 %v1100, 1.442695
        %v1137 = vpow.pop %v1136
        %v1138 = vmul.f32 %v1101, 1.442695
        %v1139 = vpow.pop %v1138
        %v1140 = vmul.f32 %v1102, 1.442695
        %v1141 = vpow.pop %v1140
        %v1142 = vmul.f32 %v1103, 1.442695
        %v1143 = vpow.pop %v1142
        %v1144 = vmul.f32 %v1104, 1.442695
        %v1145 = vpow.pop %v1144
        %v1146 = vmul.f32 %v1105, 1.442695
        %v1147 = vpow.pop %v1146
        %v1148 = vmul.f32 %v1106, 1.442695
        %v1149 = vpow.pop %v1148
        %v1150 = vmul.f32 %v1107, 1.442695
        %v1151 = vpow.pop %v1150
        %v1152 = vmul.f32 %v1108, 1.442695
        %v1153 = vpow.pop %v1152
        %v1154 = vmul.f32 %v1109, 1.442695
        %v1155 = vpow.pop %v1154
        %v1156 = vmul.f32 %v1110, 1.442695
        %v1157 = vpow.pop %v1156
        %v1158 = vmul.f32 %v1111, 1.442695
        %v1159 = vpow.pop %v1158
        %v1160 = vmul.f32 %v1112, 1.442695
        %v1161 = vpow.pop %v1160
        %v1162 = vmul.f32 %v1113, 1.442695
        %v1163 = vpow.pop %v1162
        %v1164 = vmul.f32 %v1114, 1.442695
        %v1165 = vpow.pop %v1164
        %v1166 = vmul.f32 %v1115, 1.442695
        %v1167 = vpow.pop %v1166
        %v1168 = vmul.f32 %v1116, 1.442695
        %v1169 = vpow.pop %v1168
        %v1170 = vmul.f32 %v1117, 1.442695
        %v1171 = vpow.pop %v1170
        %v1172 = vmul.f32 %v1118, 1.442695
        %v1173 = vpow.pop %v1172
        %v1174 = vmul.f32 %v1119, 1.442695
        %v1175 = vpow.pop %v1174
        %v1176 = vmul.f32 %v1120, 1.442695
        %v1177 = vpow.pop %v1176
        %v1178 = vmul.f32 %v1121, 1.442695
        %v1179 = vpow.pop %v1178
        %v1180 = vmul.f32 %v1122, 1.442695
        %v1181 = vpow.pop %v1180
        %v1182 = vmul.f32 %v1123, 1.442695
        %v1183 = vpow.pop %v1182
        %v1184 = vmul.f32 %v1124, 1.442695
        %v1185 = vpow.pop %v1184
        %v1186 = vmul.f32 %v1125, 1.442695
        %v1187 = vpow.pop %v1186
        %v1188 = vmul.f32 %v1126, 1.442695
        %v1189 = vpow.pop %v1188
        %v1190 = vmul.f32 %v1127, 1.442695
        %v1191 = vpow.pop %v1190
        %v1192 = vld [vmem:[#allocation3] sm:$0x1]
        %v1193 = vld [vmem:[#allocation3 + $0x1] sm:$0x1]
        %v1194 = vld [vmem:[#allocation3 + $0x2] sm:$0x1]
        %v1195 = vld [vmem:[#allocation3 + $0x3] sm:$0x1]
        %v1196 = vmul.f32 %v1065, %v1192
        %v1197 = vmul.f32 %v1067, %v1193
        %v1198 = vmul.f32 %v1069, %v1194
        %v1199 = vmul.f32 %v1071, %v1195
        %v1200 = vsel %vm971, %v1129, 0.0
        %v1201 = vsel %vm971, %v1131, 0.0
        %v1202 = vadd.f32 %v1200, %v1201
        %v1203 = vsel %vm971, %v1133, 0.0
        %v1204 = vadd.f32 %v1202, %v1203
        %v1205 = vsel %vm971, %v1135, 0.0
        %v1206 = vadd.f32 %v1204, %v1205
        %v1207 = vsel %vm971, %v1137, 0.0
        %v1208 = vadd.f32 %v1206, %v1207
        %v1209 = vsel %vm971, %v1139, 0.0
        %v1210 = vadd.f32 %v1208, %v1209
        %v1211 = vsel %vm971, %v1141, 0.0
        %v1212 = vadd.f32 %v1210, %v1211
        %v1213 = vsel %vm971, %v1143, 0.0
        %v1214 = vadd.f32 %v1212, %v1213
        %v1215 = vrot.slane %v1214, 4
        %v1216 = vadd.f32 %v1214, %v1215
        %v1217 = vrot.slane %v1216, 2
        %v1218 = vadd.f32 %v1216, %v1217
        %v1219 = vrot.slane %v1218, 1
        %v1220 = vadd.f32 %v1218, %v1219
        %v1221 = vsel %vm971, %v1145, 0.0
        %v1222 = vsel %vm971, %v1147, 0.0
        %v1223 = vadd.f32 %v1221, %v1222
        %v1224 = vsel %vm971, %v1149, 0.0
        %v1225 = vadd.f32 %v1223, %v1224
        %v1226 = vsel %vm971, %v1151, 0.0
        %v1227 = vadd.f32 %v1225, %v1226
        %v1228 = vsel %vm971, %v1153, 0.0
        %v1229 = vadd.f32 %v1227, %v1228
        %v1230 = vsel %vm971, %v1155, 0.0
        %v1231 = vadd.f32 %v1229, %v1230
        %v1232 = vsel %vm971, %v1157, 0.0
        %v1233 = vadd.f32 %v1231, %v1232
        %v1234 = vsel %vm971, %v1159, 0.0
        %v1235 = vadd.f32 %v1233, %v1234
        %v1236 = vrot.slane %v1235, 4
        %v1237 = vadd.f32 %v1235, %v1236
        %v1238 = vrot.slane %v1237, 2
        %v1239 = vadd.f32 %v1237, %v1238
        %v1240 = vrot.slane %v1239, 1
        %v1241 = vadd.f32 %v1239, %v1240
        %v1242 = vsel %vm971, %v1161, 0.0
        %v1243 = vsel %vm971, %v1163, 0.0
        %v1244 = vadd.f32 %v1242, %v1243
        %v1245 = vsel %vm971, %v1165, 0.0
        %v1246 = vadd.f32 %v1244, %v1245
        %v1247 = vsel %vm971, %v1167, 0.0
        %v1248 = vadd.f32 %v1246, %v1247
        %v1249 = vsel %vm971, %v1169, 0.0
        %v1250 = vadd.f32 %v1248, %v1249
        %v1251 = vsel %vm971, %v1171, 0.0
        %v1252 = vadd.f32 %v1250, %v1251
        %v1253 = vsel %vm971, %v1173, 0.0
        %v1254 = vadd.f32 %v1252, %v1253
        %v1255 = vsel %vm971, %v1175, 0.0
        %v1256 = vadd.f32 %v1254, %v1255
        %v1257 = vrot.slane %v1256, 4
        %v1258 = vadd.f32 %v1256, %v1257
        %v1259 = vrot.slane %v1258, 2
        %v1260 = vadd.f32 %v1258, %v1259
        %v1261 = vrot.slane %v1260, 1
        %v1262 = vadd.f32 %v1260, %v1261
        %v1263 = vsel %vm971, %v1177, 0.0
        %v1264 = vsel %vm971, %v1179, 0.0
        %v1265 = vadd.f32 %v1263, %v1264
        %v1266 = vsel %vm971, %v1181, 0.0
        %v1267 = vadd.f32 %v1265, %v1266
        %v1268 = vsel %vm971, %v1183, 0.0
        %v1269 = vadd.f32 %v1267, %v1268
        %v1270 = vsel %vm971, %v1185, 0.0
        %v1271 = vadd.f32 %v1269, %v1270
        %v1272 = vsel %vm971, %v1187, 0.0
        %v1273 = vadd.f32 %v1271, %v1272
        %v1274 = vsel %vm971, %v1189, 0.0
        %v1275 = vadd.f32 %v1273, %v1274
        %v1276 = vsel %vm971, %v1191, 0.0
        %v1277 = vadd.f32 %v1275, %v1276
        %v1278 = vrot.slane %v1277, 4
        %v1279 = vadd.f32 %v1277, %v1278
        %v1280 = vrot.slane %v1279, 2
        %v1281 = vadd.f32 %v1279, %v1280
        %v1282 = vrot.slane %v1281, 1
        %v1283 = vadd.f32 %v1281, %v1282
        %v1284 = vadd.f32 %v1196, %v1220
        %v1285 = vadd.f32 %v1197, %v1241
        %v1286 = vadd.f32 %v1198, %v1262
        %v1287 = vadd.f32 %v1199, %v1283
        %vm1288 = vcmask 516096
        %1289 = vst.msk [vmem:[#allocation3] sm:$0x1] %vm1288, %v1284
        %1290 = vst.msk [vmem:[#allocation3 + $0x1] sm:$0x1] %vm1288, %v1285
        %1291 = vst.msk [vmem:[#allocation3 + $0x2] sm:$0x1] %vm1288, %v1286
        %1292 = vst.msk [vmem:[#allocation3 + $0x3] sm:$0x1] %vm1288, %v1287
        %v1294 = vsel %vm971, %v318, 0
        %1296 = vmatprep.subr.mxu0 0.0
        %1297 = vmatpush1.msra.mxu0 0.0
        %1298 = vmatprep.subr.mxu0 0.0
        %1299 = vmatpush1.msra.mxu0 0.0
        %1300 = vmatprep.subr.mxu0 0.0
        %1301 = vmatpush1.msra.mxu0 0.0
        %1302 = vmatprep.subr.mxu0 0.0
        %1303 = vmatpush1.msra.mxu0 0.0
        %1304 = vmatprep.subr.mxu0 0.0
        %1305 = vmatpush1.msra.mxu0 0.0
        %1306 = vmatprep.subr.mxu0 0.0
        %1307 = vmatpush1.msra.mxu0 0.0
        %1308 = vmatprep.subr.mxu0 0.0
        %1309 = vmatpush1.msra.mxu0 0.0
        %1310 = vmatprep.subr.mxu0 0.0
        %1311 = vmatpush1.msra.mxu0 0.0
        %1312 = vmatprep.subr.mxu0 0.0
        %1313 = vmatpush1.msra.mxu0 %v1143
        %1314 = vmatprep.subr.mxu0 0.0
        %1315 = vmatpush1.msra.mxu0 %v1141
        %1316 = vmatprep.subr.mxu0 0.0
        %1317 = vmatpush1.msra.mxu0 %v1139
        %1318 = vmatprep.subr.mxu0 0.0
        %1319 = vmatpush1.msra.mxu0 %v1137
        %1320 = vmatprep.subr.mxu0 0.0
        %1321 = vmatpush1.msra.mxu0 %v1135
        %1322 = vmatprep.subr.mxu0 0.0
        %1323 = vmatpush1.msra.mxu0 %v1133
        %1324 = vmatprep.subr.mxu0 0.0
        %1325 = vmatpush1.msra.mxu0 %v1131
        %1326 = vmatprep.subr.mxu0 0.0
        %1327 = vmatpush1.msra.mxu0 %v1129
        %1328 = vmatprep.subr.mxu0 0.0
        %1329 = vmatpush2.msra.mxu0 0.0
        %1330 = vmatprep.subr.mxu0 0.0
        %1331 = vmatpush2.msra.mxu0 0.0
        %1332 = vmatprep.subr.mxu0 0.0
        %1333 = vmatpush2.msra.mxu0 0.0
        %1334 = vmatprep.subr.mxu0 0.0
        %1335 = vmatpush2.msra.mxu0 0.0
        %1336 = vmatprep.subr.mxu0 0.0
        %1337 = vmatpush2.msra.mxu0 0.0
        %1338 = vmatprep.subr.mxu0 0.0
        %1339 = vmatpush2.msra.mxu0 0.0
        %1340 = vmatprep.subr.mxu0 0.0
        %1341 = vmatpush2.msra.mxu0 0.0
        %1342 = vmatprep.subr.mxu0 0.0
        %1343 = vmatpush2.msra.mxu0 0.0
        %1344 = vmatprep.subr.mxu0 0.0
        %1345 = vmatpush2.msra.mxu0 0.0
        %1346 = vmatprep.subr.mxu0 0.0
        %1347 = vmatpush2.msra.mxu0 0.0
        %1348 = vmatprep.subr.mxu0 0.0
        %1349 = vmatpush2.msra.mxu0 0.0
        %1350 = vmatprep.subr.mxu0 0.0
        %1351 = vmatpush2.msra.mxu0 0.0
        %1352 = vmatprep.subr.mxu0 0.0
        %1353 = vmatpush2.msra.mxu0 0.0
        %1354 = vmatprep.subr.mxu0 0.0
        %1355 = vmatpush2.msra.mxu0 0.0
        %1356 = vmatprep.subr.mxu0 0.0
        %1357 = vmatpush2.msra.mxu0 0.0
        %1358 = vmatprep.subr.mxu0 0.0
        %1359 = vmatpush2.msra.mxu0 0.0
        %1360 = vmatprep.mubr.f32.mxu0 0.0
        %1361 = vmatmul.mubr.f32.gmra.mxu0 %v1294
        %v1362 = vpop.f32.mrf.mxu0
        %v1363 = vadd.f32 0.0, %v1362
        %v1364 = vpop.f32.mrf.mxu0
        %1365 = vdwg.mxu0
        %v1367 = vsel %vm971, %v319, 0
        %1369 = vmatprep.subr.mxu0 0.0
        %1370 = vmatpush1.msra.mxu0 0.0
        %1371 = vmatprep.subr.mxu0 0.0
        %1372 = vmatpush1.msra.mxu0 0.0
        %1373 = vmatprep.subr.mxu0 0.0
        %1374 = vmatpush1.msra.mxu0 0.0
        %1375 = vmatprep.subr.mxu0 0.0
        %1376 = vmatpush1.msra.mxu0 0.0
        %1377 = vmatprep.subr.mxu0 0.0
        %1378 = vmatpush1.msra.mxu0 0.0
        %1379 = vmatprep.subr.mxu0 0.0
        %1380 = vmatpush1.msra.mxu0 0.0
        %1381 = vmatprep.subr.mxu0 0.0
        %1382 = vmatpush1.msra.mxu0 0.0
        %1383 = vmatprep.subr.mxu0 0.0
        %1384 = vmatpush1.msra.mxu0 0.0
        %1385 = vmatprep.subr.mxu0 0.0
        %1386 = vmatpush1.msra.mxu0 %v1159
        %1387 = vmatprep.subr.mxu0 0.0
        %1388 = vmatpush1.msra.mxu0 %v1157
        %1389 = vmatprep.subr.mxu0 0.0
        %1390 = vmatpush1.msra.mxu0 %v1155
        %1391 = vmatprep.subr.mxu0 0.0
        %1392 = vmatpush1.msra.mxu0 %v1153
        %1393 = vmatprep.subr.mxu0 0.0
        %1394 = vmatpush1.msra.mxu0 %v1151
        %1395 = vmatprep.subr.mxu0 0.0
        %1396 = vmatpush1.msra.mxu0 %v1149
        %1397 = vmatprep.subr.mxu0 0.0
        %1398 = vmatpush1.msra.mxu0 %v1147
        %1399 = vmatprep.subr.mxu0 0.0
        %1400 = vmatpush1.msra.mxu0 %v1145
        %1401 = vmatprep.subr.mxu0 0.0
        %1402 = vmatpush2.msra.mxu0 0.0
        %1403 = vmatprep.subr.mxu0 0.0
        %1404 = vmatpush2.msra.mxu0 0.0
        %1405 = vmatprep.subr.mxu0 0.0
        %1406 = vmatpush2.msra.mxu0 0.0
        %1407 = vmatprep.subr.mxu0 0.0
        %1408 = vmatpush2.msra.mxu0 0.0
        %1409 = vmatprep.subr.mxu0 0.0
        %1410 = vmatpush2.msra.mxu0 0.0
        %1411 = vmatprep.subr.mxu0 0.0
        %1412 = vmatpush2.msra.mxu0 0.0
        %1413 = vmatprep.subr.mxu0 0.0
        %1414 = vmatpush2.msra.mxu0 0.0
        %1415 = vmatprep.subr.mxu0 0.0
        %1416 = vmatpush2.msra.mxu0 0.0
        %1417 = vmatprep.subr.mxu0 0.0
        %1418 = vmatpush2.msra.mxu0 0.0
        %1419 = vmatprep.subr.mxu0 0.0
        %1420 = vmatpush2.msra.mxu0 0.0
        %1421 = vmatprep.subr.mxu0 0.0
        %1422 = vmatpush2.msra.mxu0 0.0
        %1423 = vmatprep.subr.mxu0 0.0
        %1424 = vmatpush2.msra.mxu0 0.0
        %1425 = vmatprep.subr.mxu0 0.0
        %1426 = vmatpush2.msra.mxu0 0.0
        %1427 = vmatprep.subr.mxu0 0.0
        %1428 = vmatpush2.msra.mxu0 0.0
        %1429 = vmatprep.subr.mxu0 0.0
        %1430 = vmatpush2.msra.mxu0 0.0
        %1431 = vmatprep.subr.mxu0 0.0
        %1432 = vmatpush2.msra.mxu0 0.0
        %1433 = vmatprep.mubr.f32.mxu0 0.0
        %1434 = vmatmul.mubr.f32.gmra.mxu0 %v1367
        %v1435 = vpop.f32.mrf.mxu0
        %v1436 = vadd.f32 0.0, %v1435
        %v1437 = vpop.f32.mrf.mxu0
        %1438 = vdwg.mxu0
        %v1440 = vsel %vm971, %v320, 0
        %1442 = vmatprep.subr.mxu0 0.0
        %1443 = vmatpush1.msra.mxu0 0.0
        %1444 = vmatprep.subr.mxu0 0.0
        %1445 = vmatpush1.msra.mxu0 0.0
        %1446 = vmatprep.subr.mxu0 0.0
        %1447 = vmatpush1.msra.mxu0 0.0
        %1448 = vmatprep.subr.mxu0 0.0
        %1449 = vmatpush1.msra.mxu0 0.0
        %1450 = vmatprep.subr.mxu0 0.0
        %1451 = vmatpush1.msra.mxu0 0.0
        %1452 = vmatprep.subr.mxu0 0.0
        %1453 = vmatpush1.msra.mxu0 0.0
        %1454 = vmatprep.subr.mxu0 0.0
        %1455 = vmatpush1.msra.mxu0 0.0
        %1456 = vmatprep.subr.mxu0 0.0
        %1457 = vmatpush1.msra.mxu0 0.0
        %1458 = vmatprep.subr.mxu0 0.0
        %1459 = vmatpush1.msra.mxu0 %v1175
        %1460 = vmatprep.subr.mxu0 0.0
        %1461 = vmatpush1.msra.mxu0 %v1173
        %1462 = vmatprep.subr.mxu0 0.0
        %1463 = vmatpush1.msra.mxu0 %v1171
        %1464 = vmatprep.subr.mxu0 0.0
        %1465 = vmatpush1.msra.mxu0 %v1169
        %1466 = vmatprep.subr.mxu0 0.0
        %1467 = vmatpush1.msra.mxu0 %v1167
        %1468 = vmatprep.subr.mxu0 0.0
        %1469 = vmatpush1.msra.mxu0 %v1165
        %1470 = vmatprep.subr.mxu0 0.0
        %1471 = vmatpush1.msra.mxu0 %v1163
        %1472 = vmatprep.subr.mxu0 0.0
        %1473 = vmatpush1.msra.mxu0 %v1161
        %1474 = vmatprep.subr.mxu0 0.0
        %1475 = vmatpush2.msra.mxu0 0.0
        %1476 = vmatprep.subr.mxu0 0.0
        %1477 = vmatpush2.msra.mxu0 0.0
        %1478 = vmatprep.subr.mxu0 0.0
        %1479 = vmatpush2.msra.mxu0 0.0
        %1480 = vmatprep.subr.mxu0 0.0
        %1481 = vmatpush2.msra.mxu0 0.0
        %1482 = vmatprep.subr.mxu0 0.0
        %1483 = vmatpush2.msra.mxu0 0.0
        %1484 = vmatprep.subr.mxu0 0.0
        %1485 = vmatpush2.msra.mxu0 0.0
        %1486 = vmatprep.subr.mxu0 0.0
        %1487 = vmatpush2.msra.mxu0 0.0
        %1488 = vmatprep.subr.mxu0 0.0
        %1489 = vmatpush2.msra.mxu0 0.0
        %1490 = vmatprep.subr.mxu0 0.0
        %1491 = vmatpush2.msra.mxu0 0.0
        %1492 = vmatprep.subr.mxu0 0.0
        %1493 = vmatpush2.msra.mxu0 0.0
        %1494 = vmatprep.subr.mxu0 0.0
        %1495 = vmatpush2.msra.mxu0 0.0
        %1496 = vmatprep.subr.mxu0 0.0
        %1497 = vmatpush2.msra.mxu0 0.0
        %1498 = vmatprep.subr.mxu0 0.0
        %1499 = vmatpush2.msra.mxu0 0.0
        %1500 = vmatprep.subr.mxu0 0.0
        %1501 = vmatpush2.msra.mxu0 0.0
        %1502 = vmatprep.subr.mxu0 0.0
        %1503 = vmatpush2.msra.mxu0 0.0
        %1504 = vmatprep.subr.mxu0 0.0
        %1505 = vmatpush2.msra.mxu0 0.0
        %1506 = vmatprep.mubr.f32.mxu0 0.0
        %1507 = vmatmul.mubr.f32.gmra.mxu0 %v1440
        %v1508 = vpop.f32.mrf.mxu0
        %v1509 = vadd.f32 0.0, %v1508
        %v1510 = vpop.f32.mrf.mxu0
        %1511 = vdwg.mxu0
        %v1513 = vsel %vm971, %v321, 0
        %1515 = vmatprep.subr.mxu0 0.0
        %1516 = vmatpush1.msra.mxu0 0.0
        %1517 = vmatprep.subr.mxu0 0.0
        %1518 = vmatpush1.msra.mxu0 0.0
        %1519 = vmatprep.subr.mxu0 0.0
        %1520 = vmatpush1.msra.mxu0 0.0
        %1521 = vmatprep.subr.mxu0 0.0
        %1522 = vmatpush1.msra.mxu0 0.0
        %1523 = vmatprep.subr.mxu0 0.0
        %1524 = vmatpush1.msra.mxu0 0.0
        %1525 = vmatprep.subr.mxu0 0.0
        %1526 = vmatpush1.msra.mxu0 0.0
        %1527 = vmatprep.subr.mxu0 0.0
        %1528 = vmatpush1.msra.mxu0 0.0
        %1529 = vmatprep.subr.mxu0 0.0
        %1530 = vmatpush1.msra.mxu0 0.0
        %1531 = vmatprep.subr.mxu0 0.0
        %1532 = vmatpush1.msra.mxu0 %v1191
        %1533 = vmatprep.subr.mxu0 0.0
        %1534 = vmatpush1.msra.mxu0 %v1189
        %1535 = vmatprep.subr.mxu0 0.0
        %1536 = vmatpush1.msra.mxu0 %v1187
        %1537 = vmatprep.subr.mxu0 0.0
        %1538 = vmatpush1.msra.mxu0 %v1185
        %1539 = vmatprep.subr.mxu0 0.0
        %1540 = vmatpush1.msra.mxu0 %v1183
        %1541 = vmatprep.subr.mxu0 0.0
        %1542 = vmatpush1.msra.mxu0 %v1181
        %1543 = vmatprep.subr.mxu0 0.0
        %1544 = vmatpush1.msra.mxu0 %v1179
        %1545 = vmatprep.subr.mxu0 0.0
        %1546 = vmatpush1.msra.mxu0 %v1177
        %1547 = vmatprep.subr.mxu0 0.0
        %1548 = vmatpush2.msra.mxu0 0.0
        %1549 = vmatprep.subr.mxu0 0.0
        %1550 = vmatpush2.msra.mxu0 0.0
        %1551 = vmatprep.subr.mxu0 0.0
        %1552 = vmatpush2.msra.mxu0 0.0
        %1553 = vmatprep.subr.mxu0 0.0
        %1554 = vmatpush2.msra.mxu0 0.0
        %1555 = vmatprep.subr.mxu0 0.0
        %1556 = vmatpush2.msra.mxu0 0.0
        %1557 = vmatprep.subr.mxu0 0.0
        %1558 = vmatpush2.msra.mxu0 0.0
        %1559 = vmatprep.subr.mxu0 0.0
        %1560 = vmatpush2.msra.mxu0 0.0
        %1561 = vmatprep.subr.mxu0 0.0
        %1562 = vmatpush2.msra.mxu0 0.0
        %1563 = vmatprep.subr.mxu0 0.0
        %1564 = vmatpush2.msra.mxu0 0.0
        %1565 = vmatprep.subr.mxu0 0.0
        %1566 = vmatpush2.msra.mxu0 0.0
        %1567 = vmatprep.subr.mxu0 0.0
        %1568 = vmatpush2.msra.mxu0 0.0
        %1569 = vmatprep.subr.mxu0 0.0
        %1570 = vmatpush2.msra.mxu0 0.0
        %1571 = vmatprep.subr.mxu0 0.0
        %1572 = vmatpush2.msra.mxu0 0.0
        %1573 = vmatprep.subr.mxu0 0.0
        %1574 = vmatpush2.msra.mxu0 0.0
        %1575 = vmatprep.subr.mxu0 0.0
        %1576 = vmatpush2.msra.mxu0 0.0
        %1577 = vmatprep.subr.mxu0 0.0
        %1578 = vmatpush2.msra.mxu0 0.0
        %1579 = vmatprep.mubr.f32.mxu0 0.0
        %1580 = vmatmul.mubr.f32.gmra.mxu0 %v1513
        %v1581 = vpop.f32.mrf.mxu0
        %v1582 = vadd.f32 0.0, %v1581
        %v1583 = vpop.f32.mrf.mxu0
        %1584 = vdwg.mxu0
        %v1585 = vld [vmem:[#allocation4] sm:$0xff]
        %v1586 = vld [vmem:[#allocation4 + $0x8] sm:$0xff]
        %v1587 = vld [vmem:[#allocation4 + $0x10] sm:$0xff]
        %v1588 = vld [vmem:[#allocation4 + $0x18] sm:$0xff]
        %v1593 = vlaneseq
        %v1594 = vshrl.u32 %v1593, 7
        %v1595 = vsub.s32 0, %v1594
        %v1596 = vrot.slane %v1065, %v1595
        %v1597 = vlaneseq
        %v1598 = vshrl.u32 %v1597, 7
        %v1599 = vsub.s32 0, %v1598
        %v1600 = vrot.slane %v1067, %v1599
        %v1601 = vlaneseq
        %v1602 = vshrl.u32 %v1601, 7
        %v1603 = vsub.s32 0, %v1602
        %v1604 = vrot.slane %v1069, %v1603
        %v1605 = vlaneseq
        %v1606 = vshrl.u32 %v1605, 7
        %v1607 = vsub.s32 0, %v1606
        %v1608 = vrot.slane %v1071, %v1607
        %v1613 = vmul.f32 %v1596, %v1585
        %v1614 = vmul.f32 %v1600, %v1586
        %v1615 = vmul.f32 %v1604, %v1587
        %v1616 = vmul.f32 %v1608, %v1588
        %v1617 = vadd.f32 %v1613, %v1363
        %v1618 = vadd.f32 %v1614, %v1436
        %v1619 = vadd.f32 %v1615, %v1509
        %v1620 = vadd.f32 %v1616, %v1582
        %1621 = vst.msk [vmem:[#allocation4] sm:$0xff] %vm971, %v1617
        %1622 = vst.msk [vmem:[#allocation4 + $0x8] sm:$0xff] %vm971, %v1618
        %1623 = vst.msk [vmem:[#allocation4 + $0x10] sm:$0xff] %vm971, %v1619
        %1624 = vst.msk [vmem:[#allocation4 + $0x18] sm:$0xff] %vm971, %v1620
        %1625 = vst.msk [vmem:[#allocation2] sm:$0x1] %vm1288, %v1056
        %1626 = vst.msk [vmem:[#allocation2 + $0x1] sm:$0x1] %vm1288, %v1057
        %1627 = vst.msk [vmem:[#allocation2 + $0x2] sm:$0x1] %vm1288, %v1058
        %1628 = vst.msk [vmem:[#allocation2 + $0x3] sm:$0x1] %vm1288, %v1059
        // Predicated region
        $region49: #{tpu_custom_call.1} parent=31 // pred_check
          %p1629 = pneg %p288
        $region50: #{tpu_custom_call.1} parent=31 // pred_check_branch
          %1631 = sbr.rel (%p1629) target = $region52
        $region51: #{tpu_custom_call.1} parent=31 // pred_region
          %v1632 = vld [vmem:[#allocation4] sm:$0xff]
          %v1633 = vld [vmem:[#allocation4 + $0x8] sm:$0xff]
          %v1634 = vld [vmem:[#allocation4 + $0x10] sm:$0xff]
          %v1635 = vld [vmem:[#allocation4 + $0x18] sm:$0xff]
          %v1636 = vld [vmem:[#allocation3] sm:$0x1]
          %v1637 = vld [vmem:[#allocation3 + $0x1] sm:$0x1]
          %v1638 = vld [vmem:[#allocation3 + $0x2] sm:$0x1]
          %v1639 = vld [vmem:[#allocation3 + $0x3] sm:$0x1]
          %v1640 = vrcp.pop %v1636
          %v1641 = vmul.f32 1.0, %v1640
          %v1642 = vrcp.pop %v1637
          %v1643 = vmul.f32 1.0, %v1642
          %v1644 = vrcp.pop %v1638
          %v1645 = vmul.f32 1.0, %v1644
          %v1646 = vrcp.pop %v1639
          %v1647 = vmul.f32 1.0, %v1646
          %v1652 = vlaneseq
          %v1653 = vshrl.u32 %v1652, 7
          %v1654 = vsub.s32 0, %v1653
          %v1655 = vrot.slane %v1641, %v1654
          %v1656 = vlaneseq
          %v1657 = vshrl.u32 %v1656, 7
          %v1658 = vsub.s32 0, %v1657
          %v1659 = vrot.slane %v1643, %v1658
          %v1660 = vlaneseq
          %v1661 = vshrl.u32 %v1660, 7
          %v1662 = vsub.s32 0, %v1661
          %v1663 = vrot.slane %v1645, %v1662
          %v1664 = vlaneseq
          %v1665 = vshrl.u32 %v1664, 7
          %v1666 = vsub.s32 0, %v1665
          %v1667 = vrot.slane %v1647, %v1666
          %v1672 = vmul.f32 %v1632, %v1655
          %v1673 = vmul.f32 %v1633, %v1659
          %v1674 = vmul.f32 %v1634, %v1663
          %v1675 = vmul.f32 %v1635, %v1667
          %1676 = vst.msk [vmem:[%s283] sm:$0xff] %vm971, %v1672
          %1677 = vst.msk [vmem:[%s283 + $0x8] sm:$0xff] %vm971, %v1673
          %1678 = vst.msk [vmem:[%s283 + $0x10] sm:$0xff] %vm971, %v1674
          %1679 = vst.msk [vmem:[%s283 + $0x18] sm:$0xff] %vm971, %v1675
        $region52: #{tpu_custom_call.1} parent=31 // pred_fallthru
          _
        %s1680 = sand.u32 %s125, 1
        %s1681 = scalar_lea.sflag [#allocation7], %s1680
        %s1682 = sand.u32 %s125, 1
        %s1683 = smul.addr %s1682, 32
        %s1684 = scalar_lea.vmem [#allocation11], %s1683
        // Predicated region
        $region53: #{tpu_custom_call.1} parent=31 // pred_check
          %p1685 = pneg %p135
        $region54: #{tpu_custom_call.1} parent=31 // pred_check_branch
          %1687 = sbr.rel (%p1685) target = $region56
        $region55: #{tpu_custom_call.1} parent=31 // pred_region
          %s1688 = smul.u32 4, %s27
          %s1690 = ssub.s32 512, 512
          %1691 = vsyncadd %s1681, %s1690
          %s1692 = smul.addr %s1688, 128
          %s1693 = scalar_lea.hbm %s3, %s1692
          %s1694 = sshll.u32 %s1684, 4
          %s1695 = int_to_ptr.vmem [resolvable:$true] %s1694
          %1700 = dma.vmem_to_hbm [thread:$0]  %s1695, 512, %s1693, %s1681, 128, 128, 8
        $region56: #{tpu_custom_call.1} parent=31 // pred_fallthru
          _
      $region32: #{tpu_custom_call.1} parent=5 // pred_fallthru
        _
      %p1701 = scmp.le.s32.totalorder 2, %s18
      // Predicated region
      $region57: #{tpu_custom_call.1} parent=5 // pred_check
        %p1702 = pneg %p1701
      $region58: #{tpu_custom_call.1} parent=5 // pred_check_branch
        %1704 = sbr.rel (%p1702) target = $region60
      $region59: #{tpu_custom_call.1} parent=5 // pred_region
        %s1705 = ssub.s32 %s18, 2
        // Predicated region
        $region61: #{tpu_custom_call.1} parent=59 // pred_check
          %p1706 = pneg %p141
        $region62: #{tpu_custom_call.1} parent=59 // pred_check_branch
          %1708 = sbr.rel (%p1706) target = $region64
        $region63: #{tpu_custom_call.1} parent=59 // pred_region
          %s1709 = sand.u32 %s126, 1
          %s1710 = scalar_lea.sflag [#allocation7], %s1709
          %s1711 = sand.u32 %s126, 1
          %s1712 = smul.addr %s1711, 32
          %s1713 = scalar_lea.vmem [#allocation11], %s1712
          %1714 = dma.done %s1710, 512
        $region64: #{tpu_custom_call.1} parent=59 // pred_fallthru
          _
      $region60: #{tpu_custom_call.1} parent=5 // pred_fallthru
        _
    $region6: #{tpu_custom_call.1} parent=1 // loop_footer
      %s22 = sadd.s32 1, %s18
    $region7: #{tpu_custom_call.1} parent=1 // loop_footer_branch
      %17 = sbr.rel target = $region3
    $region8: #{tpu_custom_call.1} parent=1 // loop_exit
      _
    %1715 = vsyncpa [#allocation6], 1
    %s1716 = scalar_lea.sflag [#allocation6], 1
    %1717 = vsyncpa %s1716, 1
    %1718 = vsyncpa [#allocation9], 1
    %s1719 = scalar_lea.sflag [#allocation9], 1
    %1720 = vsyncpa %s1719, 1
    %1721 = vsyncpa [#allocation7], 1
    %s1722 = scalar_lea.sflag [#allocation7], 1
    %1723 = vsyncpa %s1722, 1

</llo_original>
